<compile_context>
chip_gen: v5e
topology: v5e:2x2
jax: 0.10.0
libtpu: 0.0.40
codegen_flags: <defaults>
</compile_context>

<pallas_src>
import jax
import jax.numpy as jnp
from jax.experimental import pallas as pl
from jax.experimental.pallas import tpu as pltpu


# --------------------------------------------------------------------------- #
# Pallas kernel
# --------------------------------------------------------------------------- #
def _snake_kernel(two_a_ref, half_inv_ref, x_ref, o_ref):
    """Snake on one (Ct, tt) tile.

    two_a_ref    : (Ct, 1) f32, 2 * alpha
    half_inv_ref : (Ct, 1) f32, 0.5 / (alpha + 1e-9)
    x_ref, o_ref : (Ct, tt) activation tile (batch dim squeezed by BlockSpec)

    x + inv_a * sin(a x)^2  ==  x + h * (1 - cos(2 a x)),  h = 0.5 * inv_a
    """
    x = x_ref[...].astype(jnp.float32)          # (Ct, tt)
    two_a = two_a_ref[...]                      # (Ct, 1)
    h = half_inv_ref[...]                       # (Ct, 1)
    o_ref[...] = (x + h * (1.0 - jnp.cos(two_a * x))).astype(o_ref.dtype)


# --------------------------------------------------------------------------- #
# Tiling helpers (VMEM byte-budgeted)
# --------------------------------------------------------------------------- #
_BLOCK_BYTE_BUDGET = 2 << 20          # ~2 MiB per block (x4 when double-buffered)


def _round_up(x, m):
    return ((x + m - 1) // m) * m


def _sublane_multiple(dtype):
    size = jnp.dtype(dtype).itemsize
    return {4: 8, 2: 16, 1: 32}.get(size, 8)


def _largest_divisor_leq(n, cap):
    cap = max(1, min(n, cap))
    for d in range(cap, 0, -1):
        if n % d == 0:
            return d
    return 1


def _pick_tiles(B, C, T, itemsize, sub, budget=_BLOCK_BYTE_BUDGET):
    """Pick (Cp, Tp, Ct, tt): padded dims + a byte-budgeted tile that divides them."""
    Cp = _round_up(C, sub)
    Tp = _round_up(max(T, 1), 128)

    # Channel tile: multiple of the sublane quantum, divides Cp, fits budget @ tt=128.
    c_units = Cp // sub
    max_c_units = max(1, budget // (sub * 128 * itemsize))
    cu = _largest_divisor_leq(c_units, max_c_units)
    Ct = cu * sub

    # Time tile: multiple of 128, divides Tp, fits budget given Ct.
    t_units = Tp // 128
    max_t_units = max(1, budget // (Ct * 128 * itemsize))
    tu = _largest_divisor_leq(t_units, max_t_units)
    tt = tu * 128

    # Guarantee >= 2 grid steps when possible (v7x megacore occupancy).
    if B * (Cp // Ct) * (Tp // tt) < 2:
        if t_units >= 2:
            tu = _largest_divisor_leq(t_units, max(1, t_units // 2))
            tt = tu * 128
        elif c_units >= 2:
            cu = _largest_divisor_leq(c_units, max(1, c_units // 2))
            Ct = cu * sub
    return Cp, Tp, Ct, tt


def _vmem_limit_bytes(pipelined_bytes):
    try:
        cap = int(pltpu.get_tpu_info().vmem_capacity_bytes)
    except Exception:
        cap = 64 << 20            # most constrained generation (v7x, per TC)
    want = pipelined_bytes + (2 << 20)          # params + headroom
    return int(min(cap // 2, max(want, 16 << 20)))


# --------------------------------------------------------------------------- #
# Wrapper
# --------------------------------------------------------------------------- #
def snake1d_pallas(x, alpha):
    """Snake1d.forward: x of shape (B, C, ...) with alpha of shape (1, C, 1)."""
    orig_shape = x.shape
    B, C = int(orig_shape[0]), int(orig_shape[1])
    x3 = x.reshape(B, C, -1)                    # matches torch snake()'s reshape
    T = int(x3.shape[-1])

    itemsize = jnp.dtype(x.dtype).itemsize
    sub = _sublane_multiple(x.dtype)
    Cp, Tp, Ct, tt = _pick_tiles(B, C, T, itemsize, sub)

    # Pre-scaled per-channel constants: 2*alpha and 0.5/(alpha + 1e-9).
    a = jnp.asarray(alpha, jnp.float32).reshape(C, 1)
    two_a = 2.0 * a
    half_inv = 0.5 / (a + 1e-9)
    if Cp > C:
        # Benign alpha = 1 for padded channels (their outputs are sliced off).
        two_a = jnp.pad(two_a, ((0, Cp - C), (0, 0)), constant_values=2.0)
        half_inv = jnp.pad(half_inv, ((0, Cp - C), (0, 0)), constant_values=0.5)

    if Cp > C or Tp > T:
        x3 = jnp.pad(x3, ((0, 0), (0, Cp - C), (0, Tp - T)))

    n_c = Cp // Ct
    n_t = Tp // tt
    n_steps = B * n_c * n_t
    block_bytes = Ct * tt * itemsize

    # Deeper pipelining only pays when blocks are small and there is work to hide.
    n_buf = 3 if (block_bytes < (512 << 10) and n_steps >= 3) else 2
    act_kwargs = dict(pipeline_mode=pl.Buffered(3)) if n_buf == 3 else {}

    in_specs = [
        pl.BlockSpec((Ct, 1), lambda b, c, t: (c, 0)),            # 2*alpha
        pl.BlockSpec((Ct, 1), lambda b, c, t: (c, 0)),            # 0.5/(alpha+1e-9)
        pl.BlockSpec((None, Ct, tt), lambda b, c, t: (b, c, t), **act_kwargs),
    ]
    out_spec = pl.BlockSpec((None, Ct, tt), lambda b, c, t: (b, c, t), **act_kwargs)

    vmem_limit = _vmem_limit_bytes(2 * n_buf * block_bytes)

    out = pl.pallas_call(
        _snake_kernel,
        out_shape=jax.ShapeDtypeStruct((B, Cp, Tp), x.dtype),
        grid=(B, n_c, n_t),
        in_specs=in_specs,
        out_specs=out_spec,
        compiler_params=pltpu.CompilerParams(
            dimension_semantics=("parallel", "parallel", "parallel"),
            vmem_limit_bytes=vmem_limit),
    )(two_a, half_inv, x3)

    if Cp > C or Tp > T:
        out = out[:, :C, :T]
    return out.reshape(orig_shape)


# --------------------------------------------------------------------------- #
# Pure-JAX reference (mirrors the torch.jit.script snake())
# --------------------------------------------------------------------------- #
def snake_ref(x, alpha):
    shape = x.shape
    x3 = x.reshape(shape[0], shape[1], -1)
    a = jnp.asarray(alpha, jnp.float32).reshape(1, shape[1], 1)
    y = x3.astype(jnp.float32) + (1.0 / (a + 1e-9)) * jnp.sin(a * x3) ** 2
    return y.astype(x.dtype).reshape(shape)


# --------------------------------------------------------------------------- #
if __name__ == "__main__":
    key = jax.random.PRNGKey(0)

    # Case 1: nicely aligned shapes (no padding path).
    B, C, T = 2, 16, 512
    kx, ka, kx2, ka2 = jax.random.split(key, 4)
    x = jax.random.normal(kx, (B, C, T), jnp.float32)
    alpha = 1.0 + 0.1 * jax.random.normal(ka, (1, C, 1), jnp.float32)

    out = jax.block_until_ready(snake1d_pallas(x, alpha))
    ref = jax.block_until_ready(snake_ref(x, alpha))
    assert out.shape == (B, C, T), out.shape
    err = float(jnp.max(jnp.abs(out - ref)))
    if err > 1e-5:
        raise AssertionError(f"case1 mismatch vs reference, max abs err = {err}")

    # Case 2: ragged T and non-multiple-of-8 C (exercises the padding path).
    B2, C2, T2 = 1, 12, 200
    x2 = jax.random.normal(kx2, (B2, C2, T2), jnp.float32)
    alpha2 = 1.0 + 0.1 * jax.random.normal(ka2, (1, C2, 1), jnp.float32)

    out2 = jax.block_until_ready(snake1d_pallas(x2, alpha2))
    ref2 = jax.block_until_ready(snake_ref(x2, alpha2))
    assert out2.shape == (B2, C2, T2), out2.shape
    err2 = float(jnp.max(jnp.abs(out2 - ref2)))
    if err2 > 1e-5:
        raise AssertionError(f"case2 mismatch vs reference, max abs err = {err2}")

    print("KERNEL_OK")
</pallas_src>

<mosaic_0001>
module attributes {stable_mosaic.version = 11 : i64} {
  func.func @_snake_kernel(%arg0: i32, %arg1: i32, %arg2: i32, %arg3: memref<16x1xf32, #tpu.memory_space<vmem>>, %arg4: memref<16x1xf32, #tpu.memory_space<vmem>>, %arg5: memref<1x16x512xf32, #tpu.memory_space<vmem>>, %arg6: memref<1x16x512xf32, #tpu.memory_space<vmem>>) attributes {dimension_semantics = [#tpu.dimension_semantics<parallel>, #tpu.dimension_semantics<parallel>, #tpu.dimension_semantics<parallel>], iteration_bounds = array<i64: 2, 1, 1>, scalar_prefetch = 0 : i64, scratch_operands = 0 : i64, tpu.core_type = #tpu.core_type<tc>, window_params = [{transform_indices = @transform_0, window_bounds = array<i64: 16, 1>}, {transform_indices = @transform_1, window_bounds = array<i64: 16, 1>}, {transform_indices = @transform_2, window_bounds = array<i64: 1, 16, 512>}, {transform_indices = @transform_3, window_bounds = array<i64: 1, 16, 512>}]} {
    %c0 = arith.constant 0 : index
    %c0_0 = arith.constant 0 : index
    %c0_1 = arith.constant 0 : index
    %0 = vector.load %arg5[%c0, %c0_0, %c0_1] : memref<1x16x512xf32, #tpu.memory_space<vmem>>, vector<1x16x512xf32>
    %1 = vector.shape_cast %0 : vector<1x16x512xf32> to vector<16x512xf32>
    %c0_2 = arith.constant 0 : index
    %c0_3 = arith.constant 0 : index
    %2 = vector.load %arg3[%c0_2, %c0_3] : memref<16x1xf32, #tpu.memory_space<vmem>>, vector<16x1xf32>
    %c0_4 = arith.constant 0 : index
    %c0_5 = arith.constant 0 : index
    %3 = vector.load %arg4[%c0_4, %c0_5] : memref<16x1xf32, #tpu.memory_space<vmem>>, vector<16x1xf32>
    %4 = vector.broadcast %2 : vector<16x1xf32> to vector<16x512xf32>
    %5 = arith.mulf %4, %1 : vector<16x512xf32>
    %6 = math.cos %5 : vector<16x512xf32>
    %cst = arith.constant 1.000000e+00 : f32
    %7 = vector.broadcast %cst : f32 to vector<16x512xf32>
    %8 = arith.subf %7, %6 : vector<16x512xf32>
    %9 = vector.broadcast %3 : vector<16x1xf32> to vector<16x512xf32>
    %10 = arith.mulf %9, %8 : vector<16x512xf32>
    %11 = arith.addf %1, %10 : vector<16x512xf32>
    %c0_6 = arith.constant 0 : index
    %c0_7 = arith.constant 0 : index
    %c0_8 = arith.constant 0 : index
    %12 = vector.load %arg6[%c0_6, %c0_7, %c0_8] : memref<1x16x512xf32, #tpu.memory_space<vmem>>, vector<1x16x512xf32>
    %13 = vector.shape_cast %12 : vector<1x16x512xf32> to vector<16x512xf32>
    %14 = vector.shape_cast %11 : vector<16x512xf32> to vector<1x16x512xf32>
    tpu.vector_store %arg6[%c0_6, %c0_7, %c0_8], %14 {strides = array<i32>} : memref<1x16x512xf32, #tpu.memory_space<vmem>>, vector<1x16x512xf32>,
    return
  }
  func.func @transform_0(%arg0: i32, %arg1: i32, %arg2: i32) -> (i32, i32) {
    %c0_i32 = arith.constant 0 : i32
    %c0_i32_0 = arith.constant 0 : i32
    return %arg1, %c0_i32 : i32, i32
  }
  func.func @transform_1(%arg0: i32, %arg1: i32, %arg2: i32) -> (i32, i32) {
    %c0_i32 = arith.constant 0 : i32
    %c0_i32_0 = arith.constant 0 : i32
    return %arg1, %c0_i32 : i32, i32
  }
  func.func @transform_2(%arg0: i32, %arg1: i32, %arg2: i32) -> (i32, i32, i32) {
    %c0_i32 = arith.constant 0 : i32
    return %arg0, %arg1, %arg2 : i32, i32, i32
  }
  func.func @transform_3(%arg0: i32, %arg1: i32, %arg2: i32) -> (i32, i32, i32) {
    %c0_i32 = arith.constant 0 : i32
    return %arg0, %arg1, %arg2 : i32, i32, i32
  }
}

</mosaic_0001>

<llo_original>
// kernel: tpu_custom_call.1
$region0: #{tpu_custom_call.1}
  #allocation0 [shape = 'u32[]', space=smem, size = 0x4, offset = 0x4, fixed_abs, tag = 'smem constant byte address 0x4 - core index']
  #allocation1 [shape = 'u32[72,128]{1,0:T(1,128)}', space=vmem, size = 0x9000, scoped, tag = 'internal scratch']
  %s0 = inlined_call_operand.vmem [shape: f32[16,1], index: 0, kind: input, shape index: {}]
  %s1 = inlined_call_operand.vmem [shape: f32[16,1], index: 1, kind: input, shape index: {}]
  %s2 = inlined_call_operand.hbm [shape: f32[2,16,512], index: 2, kind: input, shape index: {}]
  %s3 = inlined_call_operand.hbm [shape: f32[2,16,512], index: 3, kind: output, shape index: {}]
  %s4 = sld [smem:[#allocation0]]
  $region49: #{tpu_custom_call.1} parent=0
    _
  %s6 = ssub.s32 1, %s4
  %s7 = scalar_select 0, %s6, %s4
  $region1: #{tpu_custom_call.1} parent=0
    #allocation2 [shape = 'u8[65536]{0}', space=vmem, size = 0x10000, scoped, tag = 'input window, operand 2']
    #allocation3 [shape = 's32[2]{0}', space=sflag, size = 0x8, scoped, tag = 'scoped memory for tpu_custom_call.1']
    #allocation4 [shape = 's32[2]{0}', space=sflag, size = 0x8, scoped, tag = 'scoped memory for tpu_custom_call.1']
    #allocation5 [shape = 'u8[65536]{0}', space=vmem, size = 0x10000, scoped, tag = 'output window, operand 0']
    %8 = vsyncpa [#allocation3], 0
    %s9 = scalar_lea.sflag [#allocation3], 1
    %10 = vsyncpa %s9, 0
    %11 = vsyncpa [#allocation4], 0
    %s12 = scalar_lea.sflag [#allocation4], 1
    %13 = vsyncpa %s12, 0
    loop: start=0, step=1, limit=4
    $region2: #{tpu_custom_call.1} parent=1 // loop_pre_header
      _
    $region3: #{tpu_custom_call.1} parent=1 // loop_header
      %s15 = sphi 0, %s19
      %p16 = scmp.ge.s32.totalorder %s15, 4
      %s22 = sphi 0, %s41
      %s23 = sphi 0, %s37
      %s24 = sphi 0, %s33
      %s25 = sphi 0, %s22
      %s26 = sphi 0, %s23
      %s27 = sphi 0, %s24
      %s28 = sphi 0, %s25
      %s29 = sphi 0, %s26
      %s30 = sphi 0, %s27
      %s44 = sphi 0, %s46
      %s47 = sphi 0, %s44
      %s48 = sphi 0, %s47
      %s64 = sphi 0, %s48
      %s70 = sphi 0, %s72
      %s73 = sphi 0, %s70
      %s74 = sphi 0, %s73
      %s90 = sphi 0, %s74
      %s100 = sphi 0, %s102
      %s103 = sphi 0, %s100
      %s104 = sphi 0, %s103
      %s120 = sphi 0, %s104
      %s130 = sphi 0, %s132
      %s133 = sphi 0, %s130
      %s134 = sphi 0, %s133
      %s150 = sphi 0, %s134
    $region4: #{tpu_custom_call.1} parent=1 // loop_header_branch
      %18 = sbr.rel (%p16) target = $region8
    $region5: #{tpu_custom_call.1} parent=1 // loop_body
      %s20 = ssub.s32 %s15, 1
      %s21 = ssub.s32 %s15, 2
      %s31 = sadd.s32 1, %s24
      %p32 = scmp.ge.s32.totalorder %s31, 1
      %s33 = scalar_select %p32, 0, %s31
      %s34 = sadd.s32 1, %s23
      %s35 = scalar_select %p32, %s34, %s23
      %p36 = scmp.ge.s32.totalorder %s35, 1
      %s37 = scalar_select %p36, 0, %s35
      %s38 = sadd.s32 1, %s22
      %s39 = scalar_select %p36, %s38, %s22
      %p40 = scmp.ge.s32.totalorder %s39, 2
      %s41 = scalar_select %p40, 0, %s39
      %s42 = ssub.s32 %s23, %s37
      %p43 = scmp.eq.s32.totalorder %s42, 0
      %s45 = sadd.s32 %s44, 1
      %s46 = scalar_select %p43, %s44, %s45
      %p49 = pneg %p43
      %p50 = scmp.eq.s32.totalorder %s15, 1
      %p51 = por %p49, %p50
      %p52 = scmp.ne.s32.totalorder %s44, %s47
      %p53 = scmp.eq.s32.totalorder %s15, 0
      %p54 = por %p52, %p53
      %p55 = scmp.ne.s32.totalorder %s44, %s47
      %p56 = scmp.eq.s32.totalorder %s20, 1
      %p57 = por %p55, %p56
      %p58 = scmp.ne.s32.totalorder %s47, %s48
      %p59 = scmp.eq.s32.totalorder %s20, 0
      %p60 = por %p58, %p59
      %p61 = scmp.ne.s32.totalorder %s47, %s48
      %p62 = scmp.eq.s32.totalorder %s21, 1
      %p63 = por %p61, %p62
      %p65 = scmp.ne.s32.totalorder %s48, %s64
      %p66 = scmp.eq.s32.totalorder %s21, 0
      %p67 = por %p65, %p66
      %s68 = ssub.s32 %s23, %s37
      %p69 = scmp.eq.s32.totalorder %s68, 0
      %s71 = sadd.s32 %s70, 1
      %s72 = scalar_select %p69, %s70, %s71
      %p75 = pneg %p69
      %p76 = scmp.eq.s32.totalorder %s15, 1
      %p77 = por %p75, %p76
      %p78 = scmp.ne.s32.totalorder %s70, %s73
      %p79 = scmp.eq.s32.totalorder %s15, 0
      %p80 = por %p78, %p79
      %p81 = scmp.ne.s32.totalorder %s70, %s73
      %p82 = scmp.eq.s32.totalorder %s20, 1
      %p83 = por %p81, %p82
      %p84 = scmp.ne.s32.totalorder %s73, %s74
      %p85 = scmp.eq.s32.totalorder %s20, 0
      %p86 = por %p84, %p85
      %p87 = scmp.ne.s32.totalorder %s73, %s74
      %p88 = scmp.eq.s32.totalorder %s21, 1
      %p89 = por %p87, %p88
      %p91 = scmp.ne.s32.totalorder %s74, %s90
      %p92 = scmp.eq.s32.totalorder %s21, 0
      %p93 = por %p91, %p92
      %s94 = ssub.s32 %s22, %s41
      %s95 = ssub.s32 %s23, %s37
      %s96 = sor.u32 %s94, %s95
      %s97 = ssub.s32 %s24, %s33
      %s98 = sor.u32 %s96, %s97
      %p99 = scmp.eq.s32.totalorder %s98, 0
      %s101 = sadd.s32 %s100, 1
      %s102 = scalar_select %p99, %s100, %s101
      %p105 = pneg %p99
      %p106 = scmp.eq.s32.totalorder %s15, 1
      %p107 = por %p105, %p106
      %p108 = scmp.ne.s32.totalorder %s100, %s103
      %p109 = scmp.eq.s32.totalorder %s15, 0
      %p110 = por %p108, %p109
      %p111 = scmp.ne.s32.totalorder %s100, %s103
      %p112 = scmp.eq.s32.totalorder %s20, 1
      %p113 = por %p111, %p112
      %p114 = scmp.ne.s32.totalorder %s103, %s104
      %p115 = scmp.eq.s32.totalorder %s20, 0
      %p116 = por %p114, %p115
      %p117 = scmp.ne.s32.totalorder %s103, %s104
      %p118 = scmp.eq.s32.totalorder %s21, 1
      %p119 = por %p117, %p118
      %p121 = scmp.ne.s32.totalorder %s104, %s120
      %p122 = scmp.eq.s32.totalorder %s21, 0
      %p123 = por %p121, %p122
      %s124 = ssub.s32 %s22, %s41
      %s125 = ssub.s32 %s23, %s37
      %s126 = sor.u32 %s124, %s125
      %s127 = ssub.s32 %s24, %s33
      %s128 = sor.u32 %s126, %s127
      %p129 = scmp.eq.s32.totalorder %s128, 0
      %s131 = sadd.s32 %s130, 1
      %s132 = scalar_select %p129, %s130, %s131
      %p135 = pneg %p129
      %p136 = scmp.eq.s32.totalorder %s15, 1
      %p137 = por %p135, %p136
      %p138 = scmp.ne.s32.totalorder %s130, %s133
      %p139 = scmp.eq.s32.totalorder %s15, 0
      %p140 = por %p138, %p139
      %p141 = scmp.ne.s32.totalorder %s130, %s133
      %p142 = scmp.eq.s32.totalorder %s20, 1
      %p143 = por %p141, %p142
      %p144 = scmp.ne.s32.totalorder %s133, %s134
      %p145 = scmp.eq.s32.totalorder %s20, 0
      %p146 = por %p144, %p145
      %p147 = scmp.ne.s32.totalorder %s133, %s134
      %p148 = scmp.eq.s32.totalorder %s21, 1
      %p149 = por %p147, %p148
      %p151 = scmp.ne.s32.totalorder %s134, %s150
      %p152 = scmp.eq.s32.totalorder %s21, 0
      %p153 = por %p151, %p152
      %p154 = scmp.le.s32.totalorder 1, %s15
      %p155 = scmp.lt.s32.totalorder %s15, 3
      %p156 = pnand %p154, %p155
      %p157 = pneg %p156
      // Predicated region
      $region9: #{tpu_custom_call.1} parent=5 // pred_check
        _
      $region10: #{tpu_custom_call.1} parent=5 // pred_check_branch
        %159 = sbr.rel (%p156) target = $region12
      $region11: #{tpu_custom_call.1} parent=5 // pred_region
        %s160 = ssub.s32 %s15, 1
        // Predicated region
        $region13: #{tpu_custom_call.1} parent=11 // pred_check
          %p161 = pneg %p60
        $region14: #{tpu_custom_call.1} parent=11 // pred_check_branch
          %163 = sbr.rel (%p161) target = $region16
        $region15: #{tpu_custom_call.1} parent=11 // pred_region
          %s164 = smul.u32 2, %s26
          %p165 = scmp.lt.s32.totalorder %s164, 1
          %s166 = scalar_select %p165, %s164, 1
          %s167 = smul.addr %s166, 8
          %s168 = scalar_lea.vmem %s0, %s167
          %s169 = smul.u32 2, %s26
        $region16: #{tpu_custom_call.1} parent=11 // pred_fallthru
          _
        // Predicated region
        $region17: #{tpu_custom_call.1} parent=11 // pred_check
          %p170 = pneg %p86
        $region18: #{tpu_custom_call.1} parent=11 // pred_check_branch
          %172 = sbr.rel (%p170) target = $region20
        $region19: #{tpu_custom_call.1} parent=11 // pred_region
          %s173 = smul.u32 2, %s26
          %p174 = scmp.lt.s32.totalorder %s173, 1
          %s175 = scalar_select %p174, %s173, 1
          %s176 = smul.addr %s175, 8
          %s177 = scalar_lea.vmem %s1, %s176
          %s178 = smul.u32 2, %s26
        $region20: #{tpu_custom_call.1} parent=11 // pred_fallthru
          _
      $region12: #{tpu_custom_call.1} parent=5 // pred_fallthru
        _
      %p179 = scmp.lt.s32.totalorder %s15, 2
      // Predicated region
      $region21: #{tpu_custom_call.1} parent=5 // pred_check
        %p180 = pneg %p179
      $region22: #{tpu_custom_call.1} parent=5 // pred_check_branch
        %182 = sbr.rel (%p180) target = $region24
      $region23: #{tpu_custom_call.1} parent=5 // pred_region
        // Predicated region
        $region25: #{tpu_custom_call.1} parent=23 // pred_check
          %p183 = pneg %p110
        $region26: #{tpu_custom_call.1} parent=23 // pred_check_branch
          %185 = sbr.rel (%p183) target = $region28
        $region27: #{tpu_custom_call.1} parent=23 // pred_region
          %s186 = sand.u32 %s100, 1
          %s187 = scalar_lea.sflag [#allocation3], %s186
          %s188 = sand.u32 %s100, 1
          %s189 = smul.addr %s188, 64
          %s190 = scalar_lea.vmem [#allocation2], %s189
          %s191 = smul.u32 2, %s23
          %s192 = smul.u32 4, %s24
          %194 = vsyncadd %s187, 0
          %s195 = smul.addr %s191, 4
          %s196 = sadd.s32 %s192, %s195
          %s197 = smul.addr %s22, 8
          %s198 = sadd.s32 %s196, %s197
          %s199 = smul.addr %s198, 8
          %s200 = scalar_lea.hbm %s2, %s199
          %s201 = sshll.u32 %s200, 4
          %s202 = int_to_ptr.hbm [resolvable:$true] %s201
          %s203 = sshll.u32 %s190, 4
          %s204 = int_to_ptr.vmem [resolvable:$true] %s203
          %209 = dma.hbm_to_vmem [thread:$0]  %s202, 1024, %s204, %s187, 512, 512, 32
        $region28: #{tpu_custom_call.1} parent=23 // pred_fallthru
          _
      $region24: #{tpu_custom_call.1} parent=5 // pred_fallthru
        _
      %p210 = scmp.le.s32.totalorder 1, %s15
      %p211 = scmp.lt.s32.totalorder %s15, 3
      %p212 = pnand %p210, %p211
      %p213 = pneg %p212
      // Predicated region
      $region29: #{tpu_custom_call.1} parent=5 // pred_check
        _
      $region30: #{tpu_custom_call.1} parent=5 // pred_check_branch
        %215 = sbr.rel (%p212) target = $region32
      $region31: #{tpu_custom_call.1} parent=5 // pred_region
        %s216 = ssub.s32 %s15, 1
        %s217 = sand.u32 %s103, 1
        %s218 = scalar_lea.sflag [#allocation3], %s217
        %s219 = sand.u32 %s103, 1
        %s220 = smul.addr %s219, 64
        %s221 = scalar_lea.vmem [#allocation2], %s220
        // Predicated region
        $region33: #{tpu_custom_call.1} parent=31 // pred_check
          %p222 = pneg %p116
        $region34: #{tpu_custom_call.1} parent=31 // pred_check_branch
          %224 = sbr.rel (%p222) target = $region36
        $region35: #{tpu_custom_call.1} parent=31 // pred_region
          %226 = dma.done %s218, 1024
        $region36: #{tpu_custom_call.1} parent=31 // pred_fallthru
          _
        %s227 = smul.u32 2, %s26
        %p228 = scmp.lt.s32.totalorder %s227, 1
        %s229 = scalar_select %p228, %s227, 1
        %s230 = smul.addr %s229, 8
        %s231 = scalar_lea.vmem %s0, %s230
        %p232 = pneg %p60
        %p233 = pneg %p57
        %s234 = smul.u32 2, %s26
        %p235 = scmp.lt.s32.totalorder %s234, 1
        %s236 = scalar_select %p235, %s234, 1
        %s237 = smul.addr %s236, 8
        %s238 = scalar_lea.vmem %s1, %s237
        %p239 = pneg %p86
        %p240 = pneg %p83
        %s241 = sand.u32 %s103, 1
        %s242 = scalar_lea.sflag [#allocation3], %s241
        %s243 = sand.u32 %s103, 1
        %s244 = smul.addr %s243, 64
        %s245 = scalar_lea.vmem [#allocation2], %s244
        %p246 = pneg %p116
        %p247 = pneg %p113
        %p248 = pneg %p146
        %p249 = pneg %p143
        %s250 = sand.u32 %s133, 1
        %s251 = scalar_lea.sflag [#allocation4], %s250
        %s252 = sand.u32 %s133, 1
        %s253 = smul.addr %s252, 64
        %s254 = scalar_lea.vmem [#allocation5], %s253
        %s255 = smul.u32 2, %s26
        %p256 = scmp.lt.s32.totalorder %s255, 1
        %s257 = scalar_select %p256, %s255, 1
        %s258 = smul.addr %s257, 8
        %s259 = scalar_lea.vmem %s0, %s258
        %s260 = smul.u32 2, %s26
        %s261 = smul.u32 2, %s26
        %p262 = scmp.lt.s32.totalorder %s261, 1
        %s263 = scalar_select %p262, %s261, 1
        %s264 = smul.addr %s263, 8
        %s265 = scalar_lea.vmem %s1, %s264
        %s266 = smul.u32 2, %s26
        %s267 = smul.u32 2, %s26
        %s268 = smul.u32 4, %s27
        %s269 = smul.u32 2, %s26
        %s270 = smul.u32 4, %s27
        %v271 = vld [vmem:[%s221] sm:$0xff]
        %v272 = vld [vmem:[%s221 + $0x8] sm:$0xff]
        %v273 = vld [vmem:[%s221 + $0x10] sm:$0xff]
        %v274 = vld [vmem:[%s221 + $0x18] sm:$0xff]
        %v275 = vld [vmem:[%s221 + $0x20] sm:$0xff]
        %v276 = vld [vmem:[%s221 + $0x28] sm:$0xff]
        %v277 = vld [vmem:[%s221 + $0x30] sm:$0xff]
        %v278 = vld [vmem:[%s221 + $0x38] sm:$0xff]
        %v279 = vld [vmem:[%s259] sm:$0xff]
        %v280 = vld [vmem:[%s259 + $0x8] sm:$0xff]
        %v281 = vld [vmem:[%s265] sm:$0xff]
        %v282 = vld [vmem:[%s265 + $0x8] sm:$0xff]
        %284 = vset.pattern.permute.xlu0 0
        %285 = vperm.xlu0 %284, %v279
        %v286 = vpop.permute.xlu0 %285
        %289 = vset.pattern.permute.xlu0 0
        %290 = vperm.xlu0 %289, %v280
        %v291 = vpop.permute.xlu0 %290
        %v293 = vmul.f32 %v286, %v271
        %v294 = vmul.f32 %v286, %v272
        %v295 = vmul.f32 %v286, %v273
        %v296 = vmul.f32 %v286, %v274
        %v297 = vmul.f32 %v291, %v275
        %v298 = vmul.f32 %v291, %v276
        %v299 = vmul.f32 %v291, %v277
        %v300 = vmul.f32 %v291, %v278
        %v301 = vand.u32 2147483647, %v293
        %vm302 = vcmp.le.f32.partialorder %v301, 0.7853982
        %vm303 = vcmp.lt.s32.totalorder %v293, 0
        %v304 = vand.u32 %v293, 2139095040
        %v305 = vshrl.u32 %v304, 23
        %v306 = vsub.s32 %v305, 127
        %v307 = vand.u32 2147483647, %v293
        %v308 = vand.u32 %v307, 8388607
        %v309 = vor.u32 %v308, 8388608
        %v310 = vsub.s32 0, %v309
        %v311 = vadd.s32 %v306, 1
        %vm312 = vcmp.gt.s32.totalorder %v311, 0
        %v313 = vsel %vm312, %v311, 0
        %v314 = vshrl.u32 %v313, 5
        %v315 = vand.u32 %v313, 31
        %v316 = vsub.s32 32, %v315
        %v317 = vshrl.u32 683565275, %v316
        %v318 = vshll.u32 683565275, %v315
        %v319 = vshrl.u32 2475754826, %v316
        %v320 = vor.u32 %v318, %v319
        %v321 = vshll.u32 2475754826, %v315
        %v322 = vshrl.u32 2131351028, %v316
        %v323 = vor.u32 %v321, %v322
        %v324 = vshll.u32 2131351028, %v315
        %v325 = vshrl.u32 2102212464, %v316
        %v326 = vor.u32 %v324, %v325
        %v327 = vshll.u32 2102212464, %v315
        %v328 = vshrl.u32 920167782, %v316
        %v329 = vor.u32 %v327, %v328
        %v330 = vshll.u32 920167782, %v315
        %v331 = vshrl.u32 1326507024, %v316
        %v332 = vor.u32 %v330, %v331
        %vm333 = vcmp.lt.s32.totalorder %v314, 1
        %vm334 = vcmp.lt.s32.totalorder %v314, 2
        %vm335 = vcmp.lt.s32.totalorder %v314, 3
        %vm336 = vcmp.lt.s32.totalorder %v314, 4
        %v337 = vsel %vm333, %v317, %v320
        %v338 = vsel %vm336, %v326, 2102212464
        %v339 = vsel %vm335, %v323, %v338
        %v340 = vsel %vm334, %v337, %v339
        %v341 = vsel %vm333, %v320, %v323
        %v342 = vsel %vm336, %v329, 920167782
        %v343 = vsel %vm335, %v326, %v342
        %v344 = vsel %vm334, %v341, %v343
        %v345 = vsel %vm333, %v323, %v326
        %v346 = vsel %vm336, %v332, 1326507024
        %v347 = vsel %vm335, %v329, %v346
        %v348 = vsel %vm334, %v345, %v347
        %v349 = vshll.u32 %v309, 8
        %v350 = vand.u32 %v349, 65535
        %v351 = vshrl.u32 %v349, 16
        %v352 = vand.u32 %v348, 65535
        %v353 = vshrl.u32 %v348, 16
        %v354 = vmul.u32 %v350, %v352
        %v355 = vmul.u32 %v350, %v353
        %v356 = vmul.u32 %v351, %v352
        %v357 = vmul.u32 %v351, %v353
        %v358 = vshll.u32 %v355, 16
        %v359 = vshrl.u32 %v355, 16
        %v360 = vshll.u32 %v356, 16
        %v361 = vshrl.u32 %v356, 16
        %vm362 = vc.u32 %v354, %v358
        %v363 = vsel %vm362, 1, 0
        %v364 = vadd.s32 %v354, %v358
        %v365 = vadd.s32 %v357, %v363
        %vm366 = vc.u32 %v364, %v360
        %v367 = vsel %vm366, 1, 0
        %v368 = vadd.s32 %v364, %v360
        %v369 = vadd.s32 %v365, %v367
        %v370 = vadd.s32 %v369, %v359
        %v371 = vadd.s32 %v370, %v361
        %v372 = vand.u32 %v349, 65535
        %v373 = vshrl.u32 %v349, 16
        %v374 = vand.u32 %v344, 65535
        %v375 = vshrl.u32 %v344, 16
        %v376 = vmul.u32 %v372, %v374
        %v377 = vmul.u32 %v372, %v375
        %v378 = vmul.u32 %v373, %v374
        %v379 = vmul.u32 %v373, %v375
        %v380 = vshll.u32 %v377, 16
        %v381 = vshrl.u32 %v377, 16
        %v382 = vshll.u32 %v378, 16
        %v383 = vshrl.u32 %v378, 16
        %vm384 = vc.u32 %v376, %v380
        %v385 = vsel %vm384, 1, 0
        %v386 = vadd.s32 %v376, %v380
        %v387 = vadd.s32 %v379, %v385
        %vm388 = vc.u32 %v386, %v382
        %v389 = vsel %vm388, 1, 0
        %v390 = vadd.s32 %v386, %v382
        %v391 = vadd.s32 %v387, %v389
        %v392 = vadd.s32 %v391, %v381
        %v393 = vadd.s32 %v392, %v383
        %v394 = vmul.u32 %v349, %v340
        %v395 = vadd.s32 %v371, %v390
        %vm396 = vc.u32 %v371, %v390
        %v397 = vadd.s32 %v393, 1
        %v398 = vsel %vm396, %v397, %v393
        %v399 = vadd.s32 %v394, %v398
        %v400 = vadd.s32 %v399, 536870912
        %v401 = vshrl.u32 %v400, 30
        %v402 = vshll.u32 %v401, 30
        %v403 = vsub.s32 %v399, %v402
        %vm404 = vcmp.lt.s32.totalorder %v403, 0
        %v405 = vsub.s32 0, %v403
        %v406 = vsel %vm404, %v405, %v403
        %v407 = vclz %v406
        %v408 = vsub.s32 %v407, 2
        %vm409 = vcmp.gt.s32.totalorder 0, %v408
        %v410 = vsel %vm409, 0, %v408
        %v411 = vsub.s32 32, %v410
        %v412 = vshll.u32 %v403, %v410
        %v413 = vshrl.u32 %v395, %v411
        %v414 = vor.u32 %v412, %v413
        %v415 = vsub.s32 4294967266, %v410
        %v416 = vadd.s32 %v415, 127
        %v417 = vshll.u32 %v416, 23
        %v418 = vor.u32 4788187, %v417
        %v419 = vand.u32 2147483647, %v418
        %v421 = vcvt.s32.f32 %v414
        %v422 = vmul.f32 %v421, %v419
        %v423 = vxor.u32 %v422, 2147483648
        %v424 = vsel %vm303, %v423, %v422
        %v425 = vsub.s32 4, %v401
        %v426 = vsel %vm303, %v425, %v401
        %v427 = vsel %vm302, %v293, %v424
        %v428 = vsel %vm302, 0, %v426
        %v429 = vmul.f32 %v427, %v427
        %v430 = vmul.f32 %v429, -0.001358992
        %v431 = vadd.f32 %v430, 0.041655596
        %v432 = vmul.f32 %v429, %v431
        %v433 = vadd.f32 %v432, -0.4999988
        %v434 = vmul.f32 %v429, %v433
        %v435 = vadd.f32 1.0, %v434
        %v436 = vmul.f32 %v427, %v427
        %v437 = vmul.f32 %v436, -0.00019511016
        %v438 = vadd.f32 %v437, 0.008332121
        %v439 = vmul.f32 %v436, %v438
        %v440 = vadd.f32 %v439, -0.16666654
        %v441 = vmul.f32 %v436, %v440
        %v442 = vadd.f32 %v441, 1.0
        %v443 = vmul.f32 %v442, %v427
        %vm444 = vweird.f32 %v293
        %v445 = vand.u32 %v428, 3
        %vm446 = vcmp.lt.s32.totalorder %v445, 2
        %vm447 = vcmp.eq.s32.totalorder %v445, 0
        %v448 = vxor.u32 %v443, 2147483648
        %v449 = vsel %vm447, %v435, %v448
        %vm450 = vcmp.eq.s32.totalorder %v445, 2
        %v451 = vxor.u32 %v435, 2147483648
        %v452 = vsel %vm450, %v451, %v443
        %v453 = vsel %vm446, %v449, %v452
        %v454 = vsel %vm444, nan, %v453
        %v455 = vand.u32 2147483647, %v294
        %vm456 = vcmp.le.f32.partialorder %v455, 0.7853982
        %vm457 = vcmp.lt.s32.totalorder %v294, 0
        %v458 = vand.u32 %v294, 2139095040
        %v459 = vshrl.u32 %v458, 23
        %v460 = vsub.s32 %v459, 127
        %v461 = vand.u32 2147483647, %v294
        %v462 = vand.u32 %v461, 8388607
        %v463 = vor.u32 %v462, 8388608
        %v464 = vsub.s32 0, %v463
        %v465 = vadd.s32 %v460, 1
        %vm466 = vcmp.gt.s32.totalorder %v465, 0
        %v467 = vsel %vm466, %v465, 0
        %v468 = vshrl.u32 %v467, 5
        %v469 = vand.u32 %v467, 31
        %v470 = vsub.s32 32, %v469
        %v471 = vshrl.u32 683565275, %v470
        %v472 = vshll.u32 683565275, %v469
        %v473 = vshrl.u32 2475754826, %v470
        %v474 = vor.u32 %v472, %v473
        %v475 = vshll.u32 2475754826, %v469
        %v476 = vshrl.u32 2131351028, %v470
        %v477 = vor.u32 %v475, %v476
        %v478 = vshll.u32 2131351028, %v469
        %v479 = vshrl.u32 2102212464, %v470
        %v480 = vor.u32 %v478, %v479
        %v481 = vshll.u32 2102212464, %v469
        %v482 = vshrl.u32 920167782, %v470
        %v483 = vor.u32 %v481, %v482
        %v484 = vshll.u32 920167782, %v469
        %v485 = vshrl.u32 1326507024, %v470
        %v486 = vor.u32 %v484, %v485
        %vm487 = vcmp.lt.s32.totalorder %v468, 1
        %vm488 = vcmp.lt.s32.totalorder %v468, 2
        %vm489 = vcmp.lt.s32.totalorder %v468, 3
        %vm490 = vcmp.lt.s32.totalorder %v468, 4
        %v491 = vsel %vm487, %v471, %v474
        %v492 = vsel %vm490, %v480, 2102212464
        %v493 = vsel %vm489, %v477, %v492
        %v494 = vsel %vm488, %v491, %v493
        %v495 = vsel %vm487, %v474, %v477
        %v496 = vsel %vm490, %v483, 920167782
        %v497 = vsel %vm489, %v480, %v496
        %v498 = vsel %vm488, %v495, %v497
        %v499 = vsel %vm487, %v477, %v480
        %v500 = vsel %vm490, %v486, 1326507024
        %v501 = vsel %vm489, %v483, %v500
        %v502 = vsel %vm488, %v499, %v501
        %v503 = vshll.u32 %v463, 8
        %v504 = vand.u32 %v503, 65535
        %v505 = vshrl.u32 %v503, 16
        %v506 = vand.u32 %v502, 65535
        %v507 = vshrl.u32 %v502, 16
        %v508 = vmul.u32 %v504, %v506
        %v509 = vmul.u32 %v504, %v507
        %v510 = vmul.u32 %v505, %v506
        %v511 = vmul.u32 %v505, %v507
        %v512 = vshll.u32 %v509, 16
        %v513 = vshrl.u32 %v509, 16
        %v514 = vshll.u32 %v510, 16
        %v515 = vshrl.u32 %v510, 16
        %vm516 = vc.u32 %v508, %v512
        %v517 = vsel %vm516, 1, 0
        %v518 = vadd.s32 %v508, %v512
        %v519 = vadd.s32 %v511, %v517
        %vm520 = vc.u32 %v518, %v514
        %v521 = vsel %vm520, 1, 0
        %v522 = vadd.s32 %v518, %v514
        %v523 = vadd.s32 %v519, %v521
        %v524 = vadd.s32 %v523, %v513
        %v525 = vadd.s32 %v524, %v515
        %v526 = vand.u32 %v503, 65535
        %v527 = vshrl.u32 %v503, 16
        %v528 = vand.u32 %v498, 65535
        %v529 = vshrl.u32 %v498, 16
        %v530 = vmul.u32 %v526, %v528
        %v531 = vmul.u32 %v526, %v529
        %v532 = vmul.u32 %v527, %v528
        %v533 = vmul.u32 %v527, %v529
        %v534 = vshll.u32 %v531, 16
        %v535 = vshrl.u32 %v531, 16
        %v536 = vshll.u32 %v532, 16
        %v537 = vshrl.u32 %v532, 16
        %vm538 = vc.u32 %v530, %v534
        %v539 = vsel %vm538, 1, 0
        %v540 = vadd.s32 %v530, %v534
        %v541 = vadd.s32 %v533, %v539
        %vm542 = vc.u32 %v540, %v536
        %v543 = vsel %vm542, 1, 0
        %v544 = vadd.s32 %v540, %v536
        %v545 = vadd.s32 %v541, %v543
        %v546 = vadd.s32 %v545, %v535
        %v547 = vadd.s32 %v546, %v537
        %v548 = vmul.u32 %v503, %v494
        %v549 = vadd.s32 %v525, %v544
        %vm550 = vc.u32 %v525, %v544
        %v551 = vadd.s32 %v547, 1
        %v552 = vsel %vm550, %v551, %v547
        %v553 = vadd.s32 %v548, %v552
        %v554 = vadd.s32 %v553, 536870912
        %v555 = vshrl.u32 %v554, 30
        %v556 = vshll.u32 %v555, 30
        %v557 = vsub.s32 %v553, %v556
        %vm558 = vcmp.lt.s32.totalorder %v557, 0
        %v559 = vsub.s32 0, %v557
        %v560 = vsel %vm558, %v559, %v557
        %v561 = vclz %v560
        %v562 = vsub.s32 %v561, 2
        %vm563 = vcmp.gt.s32.totalorder 0, %v562
        %v564 = vsel %vm563, 0, %v562
        %v565 = vsub.s32 32, %v564
        %v566 = vshll.u32 %v557, %v564
        %v567 = vshrl.u32 %v549, %v565
        %v568 = vor.u32 %v566, %v567
        %v569 = vsub.s32 4294967266, %v564
        %v570 = vadd.s32 %v569, 127
        %v571 = vshll.u32 %v570, 23
        %v572 = vor.u32 4788187, %v571
        %v573 = vand.u32 2147483647, %v572
        %v575 = vcvt.s32.f32 %v568
        %v576 = vmul.f32 %v575, %v573
        %v577 = vxor.u32 %v576, 2147483648
        %v578 = vsel %vm457, %v577, %v576
        %v579 = vsub.s32 4, %v555
        %v580 = vsel %vm457, %v579, %v555
        %v581 = vsel %vm456, %v294, %v578
        %v582 = vsel %vm456, 0, %v580
        %v583 = vmul.f32 %v581, %v581
        %v584 = vmul.f32 %v583, -0.001358992
        %v585 = vadd.f32 %v584, 0.041655596
        %v586 = vmul.f32 %v583, %v585
        %v587 = vadd.f32 %v586, -0.4999988
        %v588 = vmul.f32 %v583, %v587
        %v589 = vadd.f32 1.0, %v588
        %v590 = vmul.f32 %v581, %v581
        %v591 = vmul.f32 %v590, -0.00019511016
        %v592 = vadd.f32 %v591, 0.008332121
        %v593 = vmul.f32 %v590, %v592
        %v594 = vadd.f32 %v593, -0.16666654
        %v595 = vmul.f32 %v590, %v594
        %v596 = vadd.f32 %v595, 1.0
        %v597 = vmul.f32 %v596, %v581
        %vm598 = vweird.f32 %v294
        %v599 = vand.u32 %v582, 3
        %vm600 = vcmp.lt.s32.totalorder %v599, 2
        %vm601 = vcmp.eq.s32.totalorder %v599, 0
        %v602 = vxor.u32 %v597, 2147483648
        %v603 = vsel %vm601, %v589, %v602
        %vm604 = vcmp.eq.s32.totalorder %v599, 2
        %v605 = vxor.u32 %v589, 2147483648
        %v606 = vsel %vm604, %v605, %v597
        %v607 = vsel %vm600, %v603, %v606
        %v608 = vsel %vm598, nan, %v607
        %v609 = vand.u32 2147483647, %v295
        %vm610 = vcmp.le.f32.partialorder %v609, 0.7853982
        %vm611 = vcmp.lt.s32.totalorder %v295, 0
        %v612 = vand.u32 %v295, 2139095040
        %v613 = vshrl.u32 %v612, 23
        %v614 = vsub.s32 %v613, 127
        %v615 = vand.u32 2147483647, %v295
        %v616 = vand.u32 %v615, 8388607
        %v617 = vor.u32 %v616, 8388608
        %v618 = vsub.s32 0, %v617
        %v619 = vadd.s32 %v614, 1
        %vm620 = vcmp.gt.s32.totalorder %v619, 0
        %v621 = vsel %vm620, %v619, 0
        %v622 = vshrl.u32 %v621, 5
        %v623 = vand.u32 %v621, 31
        %v624 = vsub.s32 32, %v623
        %v625 = vshrl.u32 683565275, %v624
        %v626 = vshll.u32 683565275, %v623
        %v627 = vshrl.u32 2475754826, %v624
        %v628 = vor.u32 %v626, %v627
        %v629 = vshll.u32 2475754826, %v623
        %v630 = vshrl.u32 2131351028, %v624
        %v631 = vor.u32 %v629, %v630
        %v632 = vshll.u32 2131351028, %v623
        %v633 = vshrl.u32 2102212464, %v624
        %v634 = vor.u32 %v632, %v633
        %v635 = vshll.u32 2102212464, %v623
        %v636 = vshrl.u32 920167782, %v624
        %v637 = vor.u32 %v635, %v636
        %v638 = vshll.u32 920167782, %v623
        %v639 = vshrl.u32 1326507024, %v624
        %v640 = vor.u32 %v638, %v639
        %vm641 = vcmp.lt.s32.totalorder %v622, 1
        %vm642 = vcmp.lt.s32.totalorder %v622, 2
        %vm643 = vcmp.lt.s32.totalorder %v622, 3
        %vm644 = vcmp.lt.s32.totalorder %v622, 4
        %v645 = vsel %vm641, %v625, %v628
        %v646 = vsel %vm644, %v634, 2102212464
        %v647 = vsel %vm643, %v631, %v646
        %v648 = vsel %vm642, %v645, %v647
        %v649 = vsel %vm641, %v628, %v631
        %v650 = vsel %vm644, %v637, 920167782
        %v651 = vsel %vm643, %v634, %v650
        %v652 = vsel %vm642, %v649, %v651
        %v653 = vsel %vm641, %v631, %v634
        %v654 = vsel %vm644, %v640, 1326507024
        %v655 = vsel %vm643, %v637, %v654
        %v656 = vsel %vm642, %v653, %v655
        %v657 = vshll.u32 %v617, 8
        %v658 = vand.u32 %v657, 65535
        %v659 = vshrl.u32 %v657, 16
        %v660 = vand.u32 %v656, 65535
        %v661 = vshrl.u32 %v656, 16
        %v662 = vmul.u32 %v658, %v660
        %v663 = vmul.u32 %v658, %v661
        %v664 = vmul.u32 %v659, %v660
        %v665 = vmul.u32 %v659, %v661
        %v666 = vshll.u32 %v663, 16
        %v667 = vshrl.u32 %v663, 16
        %v668 = vshll.u32 %v664, 16
        %v669 = vshrl.u32 %v664, 16
        %vm670 = vc.u32 %v662, %v666
        %v671 = vsel %vm670, 1, 0
        %v672 = vadd.s32 %v662, %v666
        %v673 = vadd.s32 %v665, %v671
        %vm674 = vc.u32 %v672, %v668
        %v675 = vsel %vm674, 1, 0
        %v676 = vadd.s32 %v672, %v668
        %v677 = vadd.s32 %v673, %v675
        %v678 = vadd.s32 %v677, %v667
        %v679 = vadd.s32 %v678, %v669
        %v680 = vand.u32 %v657, 65535
        %v681 = vshrl.u32 %v657, 16
        %v682 = vand.u32 %v652, 65535
        %v683 = vshrl.u32 %v652, 16
        %v684 = vmul.u32 %v680, %v682
        %v685 = vmul.u32 %v680, %v683
        %v686 = vmul.u32 %v681, %v682
        %v687 = vmul.u32 %v681, %v683
        %v688 = vshll.u32 %v685, 16
        %v689 = vshrl.u32 %v685, 16
        %v690 = vshll.u32 %v686, 16
        %v691 = vshrl.u32 %v686, 16
        %vm692 = vc.u32 %v684, %v688
        %v693 = vsel %vm692, 1, 0
        %v694 = vadd.s32 %v684, %v688
        %v695 = vadd.s32 %v687, %v693
        %vm696 = vc.u32 %v694, %v690
        %v697 = vsel %vm696, 1, 0
        %v698 = vadd.s32 %v694, %v690
        %v699 = vadd.s32 %v695, %v697
        %v700 = vadd.s32 %v699, %v689
        %v701 = vadd.s32 %v700, %v691
        %v702 = vmul.u32 %v657, %v648
        %v703 = vadd.s32 %v679, %v698
        %vm704 = vc.u32 %v679, %v698
        %v705 = vadd.s32 %v701, 1
        %v706 = vsel %vm704, %v705, %v701
        %v707 = vadd.s32 %v702, %v706
        %v708 = vadd.s32 %v707, 536870912
        %v709 = vshrl.u32 %v708, 30
        %v710 = vshll.u32 %v709, 30
        %v711 = vsub.s32 %v707, %v710
        %vm712 = vcmp.lt.s32.totalorder %v711, 0
        %v713 = vsub.s32 0, %v711
        %v714 = vsel %vm712, %v713, %v711
        %v715 = vclz %v714
        %v716 = vsub.s32 %v715, 2
        %vm717 = vcmp.gt.s32.totalorder 0, %v716
        %v718 = vsel %vm717, 0, %v716
        %v719 = vsub.s32 32, %v718
        %v720 = vshll.u32 %v711, %v718
        %v721 = vshrl.u32 %v703, %v719
        %v722 = vor.u32 %v720, %v721
        %v723 = vsub.s32 4294967266, %v718
        %v724 = vadd.s32 %v723, 127
        %v725 = vshll.u32 %v724, 23
        %v726 = vor.u32 4788187, %v725
        %v727 = vand.u32 2147483647, %v726
        %v729 = vcvt.s32.f32 %v722
        %v730 = vmul.f32 %v729, %v727
        %v731 = vxor.u32 %v730, 2147483648
        %v732 = vsel %vm611, %v731, %v730
        %v733 = vsub.s32 4, %v709
        %v734 = vsel %vm611, %v733, %v709
        %v735 = vsel %vm610, %v295, %v732
        %v736 = vsel %vm610, 0, %v734
        %v737 = vmul.f32 %v735, %v735
        %v738 = vmul.f32 %v737, -0.001358992
        %v739 = vadd.f32 %v738, 0.041655596
        %v740 = vmul.f32 %v737, %v739
        %v741 = vadd.f32 %v740, -0.4999988
        %v742 = vmul.f32 %v737, %v741
        %v743 = vadd.f32 1.0, %v742
        %v744 = vmul.f32 %v735, %v735
        %v745 = vmul.f32 %v744, -0.00019511016
        %v746 = vadd.f32 %v745, 0.008332121
        %v747 = vmul.f32 %v744, %v746
        %v748 = vadd.f32 %v747, -0.16666654
        %v749 = vmul.f32 %v744, %v748
        %v750 = vadd.f32 %v749, 1.0
        %v751 = vmul.f32 %v750, %v735
        %vm752 = vweird.f32 %v295
        %v753 = vand.u32 %v736, 3
        %vm754 = vcmp.lt.s32.totalorder %v753, 2
        %vm755 = vcmp.eq.s32.totalorder %v753, 0
        %v756 = vxor.u32 %v751, 2147483648
        %v757 = vsel %vm755, %v743, %v756
        %vm758 = vcmp.eq.s32.totalorder %v753, 2
        %v759 = vxor.u32 %v743, 2147483648
        %v760 = vsel %vm758, %v759, %v751
        %v761 = vsel %vm754, %v757, %v760
        %v762 = vsel %vm752, nan, %v761
        %v763 = vand.u32 2147483647, %v296
        %vm764 = vcmp.le.f32.partialorder %v763, 0.7853982
        %vm765 = vcmp.lt.s32.totalorder %v296, 0
        %v766 = vand.u32 %v296, 2139095040
        %v767 = vshrl.u32 %v766, 23
        %v768 = vsub.s32 %v767, 127
        %v769 = vand.u32 2147483647, %v296
        %v770 = vand.u32 %v769, 8388607
        %v771 = vor.u32 %v770, 8388608
        %v772 = vsub.s32 0, %v771
        %v773 = vadd.s32 %v768, 1
        %vm774 = vcmp.gt.s32.totalorder %v773, 0
        %v775 = vsel %vm774, %v773, 0
        %v776 = vshrl.u32 %v775, 5
        %v777 = vand.u32 %v775, 31
        %v778 = vsub.s32 32, %v777
        %v779 = vshrl.u32 683565275, %v778
        %v780 = vshll.u32 683565275, %v777
        %v781 = vshrl.u32 2475754826, %v778
        %v782 = vor.u32 %v780, %v781
        %v783 = vshll.u32 2475754826, %v777
        %v784 = vshrl.u32 2131351028, %v778
        %v785 = vor.u32 %v783, %v784
        %v786 = vshll.u32 2131351028, %v777
        %v787 = vshrl.u32 2102212464, %v778
        %v788 = vor.u32 %v786, %v787
        %v789 = vshll.u32 2102212464, %v777
        %v790 = vshrl.u32 920167782, %v778
        %v791 = vor.u32 %v789, %v790
        %v792 = vshll.u32 920167782, %v777
        %v793 = vshrl.u32 1326507024, %v778
        %v794 = vor.u32 %v792, %v793
        %vm795 = vcmp.lt.s32.totalorder %v776, 1
        %vm796 = vcmp.lt.s32.totalorder %v776, 2
        %vm797 = vcmp.lt.s32.totalorder %v776, 3
        %vm798 = vcmp.lt.s32.totalorder %v776, 4
        %v799 = vsel %vm795, %v779, %v782
        %v800 = vsel %vm798, %v788, 2102212464
        %v801 = vsel %vm797, %v785, %v800
        %v802 = vsel %vm796, %v799, %v801
        %v803 = vsel %vm795, %v782, %v785
        %v804 = vsel %vm798, %v791, 920167782
        %v805 = vsel %vm797, %v788, %v804
        %v806 = vsel %vm796, %v803, %v805
        %v807 = vsel %vm795, %v785, %v788
        %v808 = vsel %vm798, %v794, 1326507024
        %v809 = vsel %vm797, %v791, %v808
        %v810 = vsel %vm796, %v807, %v809
        %v811 = vshll.u32 %v771, 8
        %v812 = vand.u32 %v811, 65535
        %v813 = vshrl.u32 %v811, 16
        %v814 = vand.u32 %v810, 65535
        %v815 = vshrl.u32 %v810, 16
        %v816 = vmul.u32 %v812, %v814
        %v817 = vmul.u32 %v812, %v815
        %v818 = vmul.u32 %v813, %v814
        %v819 = vmul.u32 %v813, %v815
        %v820 = vshll.u32 %v817, 16
        %v821 = vshrl.u32 %v817, 16
        %v822 = vshll.u32 %v818, 16
        %v823 = vshrl.u32 %v818, 16
        %vm824 = vc.u32 %v816, %v820
        %v825 = vsel %vm824, 1, 0
        %v826 = vadd.s32 %v816, %v820
        %v827 = vadd.s32 %v819, %v825
        %vm828 = vc.u32 %v826, %v822
        %v829 = vsel %vm828, 1, 0
        %v830 = vadd.s32 %v826, %v822
        %v831 = vadd.s32 %v827, %v829
        %v832 = vadd.s32 %v831, %v821
        %v833 = vadd.s32 %v832, %v823
        %v834 = vand.u32 %v811, 65535
        %v835 = vshrl.u32 %v811, 16
        %v836 = vand.u32 %v806, 65535
        %v837 = vshrl.u32 %v806, 16
        %v838 = vmul.u32 %v834, %v836
        %v839 = vmul.u32 %v834, %v837
        %v840 = vmul.u32 %v835, %v836
        %v841 = vmul.u32 %v835, %v837
        %v842 = vshll.u32 %v839, 16
        %v843 = vshrl.u32 %v839, 16
        %v844 = vshll.u32 %v840, 16
        %v845 = vshrl.u32 %v840, 16
        %vm846 = vc.u32 %v838, %v842
        %v847 = vsel %vm846, 1, 0
        %v848 = vadd.s32 %v838, %v842
        %v849 = vadd.s32 %v841, %v847
        %vm850 = vc.u32 %v848, %v844
        %v851 = vsel %vm850, 1, 0
        %v852 = vadd.s32 %v848, %v844
        %v853 = vadd.s32 %v849, %v851
        %v854 = vadd.s32 %v853, %v843
        %v855 = vadd.s32 %v854, %v845
        %v856 = vmul.u32 %v811, %v802
        %v857 = vadd.s32 %v833, %v852
        %vm858 = vc.u32 %v833, %v852
        %v859 = vadd.s32 %v855, 1
        %v860 = vsel %vm858, %v859, %v855
        %v861 = vadd.s32 %v856, %v860
        %v862 = vadd.s32 %v861, 536870912
        %v863 = vshrl.u32 %v862, 30
        %v864 = vshll.u32 %v863, 30
        %v865 = vsub.s32 %v861, %v864
        %vm866 = vcmp.lt.s32.totalorder %v865, 0
        %v867 = vsub.s32 0, %v865
        %v868 = vsel %vm866, %v867, %v865
        %v869 = vclz %v868
        %v870 = vsub.s32 %v869, 2
        %vm871 = vcmp.gt.s32.totalorder 0, %v870
        %v872 = vsel %vm871, 0, %v870
        %v873 = vsub.s32 32, %v872
        %v874 = vshll.u32 %v865, %v872
        %v875 = vshrl.u32 %v857, %v873
        %v876 = vor.u32 %v874, %v875
        %v877 = vsub.s32 4294967266, %v872
        %v878 = vadd.s32 %v877, 127
        %v879 = vshll.u32 %v878, 23
        %v880 = vor.u32 4788187, %v879
        %v881 = vand.u32 2147483647, %v880
        %v883 = vcvt.s32.f32 %v876
        %v884 = vmul.f32 %v883, %v881
        %v885 = vxor.u32 %v884, 2147483648
        %v886 = vsel %vm765, %v885, %v884
        %v887 = vsub.s32 4, %v863
        %v888 = vsel %vm765, %v887, %v863
        %v889 = vsel %vm764, %v296, %v886
        %v890 = vsel %vm764, 0, %v888
        %v891 = vmul.f32 %v889, %v889
        %v892 = vmul.f32 %v891, -0.001358992
        %v893 = vadd.f32 %v892, 0.041655596
        %v894 = vmul.f32 %v891, %v893
        %v895 = vadd.f32 %v894, -0.4999988
        %v896 = vmul.f32 %v891, %v895
        %v897 = vadd.f32 1.0, %v896
        %v898 = vmul.f32 %v889, %v889
        %v899 = vmul.f32 %v898, -0.00019511016
        %v900 = vadd.f32 %v899, 0.008332121
        %v901 = vmul.f32 %v898, %v900
        %v902 = vadd.f32 %v901, -0.16666654
        %v903 = vmul.f32 %v898, %v902
        %v904 = vadd.f32 %v903, 1.0
        %v905 = vmul.f32 %v904, %v889
        %vm906 = vweird.f32 %v296
        %v907 = vand.u32 %v890, 3
        %vm908 = vcmp.lt.s32.totalorder %v907, 2
        %vm909 = vcmp.eq.s32.totalorder %v907, 0
        %v910 = vxor.u32 %v905, 2147483648
        %v911 = vsel %vm909, %v897, %v910
        %vm912 = vcmp.eq.s32.totalorder %v907, 2
        %v913 = vxor.u32 %v897, 2147483648
        %v914 = vsel %vm912, %v913, %v905
        %v915 = vsel %vm908, %v911, %v914
        %v916 = vsel %vm906, nan, %v915
        %v917 = vand.u32 2147483647, %v297
        %vm918 = vcmp.le.f32.partialorder %v917, 0.7853982
        %vm919 = vcmp.lt.s32.totalorder %v297, 0
        %v920 = vand.u32 %v297, 2139095040
        %v921 = vshrl.u32 %v920, 23
        %v922 = vsub.s32 %v921, 127
        %v923 = vand.u32 2147483647, %v297
        %v924 = vand.u32 %v923, 8388607
        %v925 = vor.u32 %v924, 8388608
        %v926 = vsub.s32 0, %v925
        %v927 = vadd.s32 %v922, 1
        %vm928 = vcmp.gt.s32.totalorder %v927, 0
        %v929 = vsel %vm928, %v927, 0
        %v930 = vshrl.u32 %v929, 5
        %v931 = vand.u32 %v929, 31
        %v932 = vsub.s32 32, %v931
        %v933 = vshrl.u32 683565275, %v932
        %v934 = vshll.u32 683565275, %v931
        %v935 = vshrl.u32 2475754826, %v932
        %v936 = vor.u32 %v934, %v935
        %v937 = vshll.u32 2475754826, %v931
        %v938 = vshrl.u32 2131351028, %v932
        %v939 = vor.u32 %v937, %v938
        %v940 = vshll.u32 2131351028, %v931
        %v941 = vshrl.u32 2102212464, %v932
        %v942 = vor.u32 %v940, %v941
        %v943 = vshll.u32 2102212464, %v931
        %v944 = vshrl.u32 920167782, %v932
        %v945 = vor.u32 %v943, %v944
        %v946 = vshll.u32 920167782, %v931
        %v947 = vshrl.u32 1326507024, %v932
        %v948 = vor.u32 %v946, %v947
        %vm949 = vcmp.lt.s32.totalorder %v930, 1
        %vm950 = vcmp.lt.s32.totalorder %v930, 2
        %vm951 = vcmp.lt.s32.totalorder %v930, 3
        %vm952 = vcmp.lt.s32.totalorder %v930, 4
        %v953 = vsel %vm949, %v933, %v936
        %v954 = vsel %vm952, %v942, 2102212464
        %v955 = vsel %vm951, %v939, %v954
        %v956 = vsel %vm950, %v953, %v955
        %v957 = vsel %vm949, %v936, %v939
        %v958 = vsel %vm952, %v945, 920167782
        %v959 = vsel %vm951, %v942, %v958
        %v960 = vsel %vm950, %v957, %v959
        %v961 = vsel %vm949, %v939, %v942
        %v962 = vsel %vm952, %v948, 1326507024
        %v963 = vsel %vm951, %v945, %v962
        %v964 = vsel %vm950, %v961, %v963
        %v965 = vshll.u32 %v925, 8
        %v966 = vand.u32 %v965, 65535
        %v967 = vshrl.u32 %v965, 16
        %v968 = vand.u32 %v964, 65535
        %v969 = vshrl.u32 %v964, 16
        %v970 = vmul.u32 %v966, %v968
        %v971 = vmul.u32 %v966, %v969
        %v972 = vmul.u32 %v967, %v968
        %v973 = vmul.u32 %v967, %v969
        %v974 = vshll.u32 %v971, 16
        %v975 = vshrl.u32 %v971, 16
        %v976 = vshll.u32 %v972, 16
        %v977 = vshrl.u32 %v972, 16
        %vm978 = vc.u32 %v970, %v974
        %v979 = vsel %vm978, 1, 0
        %v980 = vadd.s32 %v970, %v974
        %v981 = vadd.s32 %v973, %v979
        %vm982 = vc.u32 %v980, %v976
        %v983 = vsel %vm982, 1, 0
        %v984 = vadd.s32 %v980, %v976
        %v985 = vadd.s32 %v981, %v983
        %v986 = vadd.s32 %v985, %v975
        %v987 = vadd.s32 %v986, %v977
        %v988 = vand.u32 %v965, 65535
        %v989 = vshrl.u32 %v965, 16
        %v990 = vand.u32 %v960, 65535
        %v991 = vshrl.u32 %v960, 16
        %v992 = vmul.u32 %v988, %v990
        %v993 = vmul.u32 %v988, %v991
        %v994 = vmul.u32 %v989, %v990
        %v995 = vmul.u32 %v989, %v991
        %v996 = vshll.u32 %v993, 16
        %v997 = vshrl.u32 %v993, 16
        %v998 = vshll.u32 %v994, 16
        %v999 = vshrl.u32 %v994, 16
        %vm1000 = vc.u32 %v992, %v996
        %v1001 = vsel %vm1000, 1, 0
        %v1002 = vadd.s32 %v992, %v996
        %v1003 = vadd.s32 %v995, %v1001
        %vm1004 = vc.u32 %v1002, %v998
        %v1005 = vsel %vm1004, 1, 0
        %v1006 = vadd.s32 %v1002, %v998
        %v1007 = vadd.s32 %v1003, %v1005
        %v1008 = vadd.s32 %v1007, %v997
        %v1009 = vadd.s32 %v1008, %v999
        %v1010 = vmul.u32 %v965, %v956
        %v1011 = vadd.s32 %v987, %v1006
        %vm1012 = vc.u32 %v987, %v1006
        %v1013 = vadd.s32 %v1009, 1
        %v1014 = vsel %vm1012, %v1013, %v1009
        %v1015 = vadd.s32 %v1010, %v1014
        %v1016 = vadd.s32 %v1015, 536870912
        %v1017 = vshrl.u32 %v1016, 30
        %v1018 = vshll.u32 %v1017, 30
        %v1019 = vsub.s32 %v1015, %v1018
        %vm1020 = vcmp.lt.s32.totalorder %v1019, 0
        %v1021 = vsub.s32 0, %v1019
        %v1022 = vsel %vm1020, %v1021, %v1019
        %v1023 = vclz %v1022
        %v1024 = vsub.s32 %v1023, 2
        %vm1025 = vcmp.gt.s32.totalorder 0, %v1024
        %v1026 = vsel %vm1025, 0, %v1024
        %v1027 = vsub.s32 32, %v1026
        %v1028 = vshll.u32 %v1019, %v1026
        %v1029 = vshrl.u32 %v1011, %v1027
        %v1030 = vor.u32 %v1028, %v1029
        %v1031 = vsub.s32 4294967266, %v1026
        %v1032 = vadd.s32 %v1031, 127
        %v1033 = vshll.u32 %v1032, 23
        %v1034 = vor.u32 4788187, %v1033
        %v1035 = vand.u32 2147483647, %v1034
        %v1037 = vcvt.s32.f32 %v1030
        %v1038 = vmul.f32 %v1037, %v1035
        %v1039 = vxor.u32 %v1038, 2147483648
        %v1040 = vsel %vm919, %v1039, %v1038
        %v1041 = vsub.s32 4, %v1017
        %v1042 = vsel %vm919, %v1041, %v1017
        %v1043 = vsel %vm918, %v297, %v1040
        %v1044 = vsel %vm918, 0, %v1042
        %v1045 = vmul.f32 %v1043, %v1043
        %v1046 = vmul.f32 %v1045, -0.001358992
        %v1047 = vadd.f32 %v1046, 0.041655596
        %v1048 = vmul.f32 %v1045, %v1047
        %v1049 = vadd.f32 %v1048, -0.4999988
        %v1050 = vmul.f32 %v1045, %v1049
        %v1051 = vadd.f32 1.0, %v1050
        %v1052 = vmul.f32 %v1043, %v1043
        %v1053 = vmul.f32 %v1052, -0.00019511016
        %v1054 = vadd.f32 %v1053, 0.008332121
        %v1055 = vmul.f32 %v1052, %v1054
        %v1056 = vadd.f32 %v1055, -0.16666654
        %v1057 = vmul.f32 %v1052, %v1056
        %v1058 = vadd.f32 %v1057, 1.0
        %v1059 = vmul.f32 %v1058, %v1043
        %vm1060 = vweird.f32 %v297
        %v1061 = vand.u32 %v1044, 3
        %vm1062 = vcmp.lt.s32.totalorder %v1061, 2
        %vm1063 = vcmp.eq.s32.totalorder %v1061, 0
        %v1064 = vxor.u32 %v1059, 2147483648
        %v1065 = vsel %vm1063, %v1051, %v1064
        %vm1066 = vcmp.eq.s32.totalorder %v1061, 2
        %v1067 = vxor.u32 %v1051, 2147483648
        %v1068 = vsel %vm1066, %v1067, %v1059
        %v1069 = vsel %vm1062, %v1065, %v1068
        %v1070 = vsel %vm1060, nan, %v1069
        %v1071 = vand.u32 2147483647, %v298
        %vm1072 = vcmp.le.f32.partialorder %v1071, 0.7853982
        %vm1073 = vcmp.lt.s32.totalorder %v298, 0
        %v1074 = vand.u32 %v298, 2139095040
        %v1075 = vshrl.u32 %v1074, 23
        %v1076 = vsub.s32 %v1075, 127
        %v1077 = vand.u32 2147483647, %v298
        %v1078 = vand.u32 %v1077, 8388607
        %v1079 = vor.u32 %v1078, 8388608
        %v1080 = vsub.s32 0, %v1079
        %v1081 = vadd.s32 %v1076, 1
        %vm1082 = vcmp.gt.s32.totalorder %v1081, 0
        %v1083 = vsel %vm1082, %v1081, 0
        %v1084 = vshrl.u32 %v1083, 5
        %v1085 = vand.u32 %v1083, 31
        %v1086 = vsub.s32 32, %v1085
        %v1087 = vshrl.u32 683565275, %v1086
        %v1088 = vshll.u32 683565275, %v1085
        %v1089 = vshrl.u32 2475754826, %v1086
        %v1090 = vor.u32 %v1088, %v1089
        %v1091 = vshll.u32 2475754826, %v1085
        %v1092 = vshrl.u32 2131351028, %v1086
        %v1093 = vor.u32 %v1091, %v1092
        %v1094 = vshll.u32 2131351028, %v1085
        %v1095 = vshrl.u32 2102212464, %v1086
        %v1096 = vor.u32 %v1094, %v1095
        %v1097 = vshll.u32 2102212464, %v1085
        %v1098 = vshrl.u32 920167782, %v1086
        %v1099 = vor.u32 %v1097, %v1098
        %v1100 = vshll.u32 920167782, %v1085
        %v1101 = vshrl.u32 1326507024, %v1086
        %v1102 = vor.u32 %v1100, %v1101
        %vm1103 = vcmp.lt.s32.totalorder %v1084, 1
        %vm1104 = vcmp.lt.s32.totalorder %v1084, 2
        %vm1105 = vcmp.lt.s32.totalorder %v1084, 3
        %vm1106 = vcmp.lt.s32.totalorder %v1084, 4
        %v1107 = vsel %vm1103, %v1087, %v1090
        %v1108 = vsel %vm1106, %v1096, 2102212464
        %v1109 = vsel %vm1105, %v1093, %v1108
        %v1110 = vsel %vm1104, %v1107, %v1109
        %v1111 = vsel %vm1103, %v1090, %v1093
        %v1112 = vsel %vm1106, %v1099, 920167782
        %v1113 = vsel %vm1105, %v1096, %v1112
        %v1114 = vsel %vm1104, %v1111, %v1113
        %v1115 = vsel %vm1103, %v1093, %v1096
        %v1116 = vsel %vm1106, %v1102, 1326507024
        %v1117 = vsel %vm1105, %v1099, %v1116
        %v1118 = vsel %vm1104, %v1115, %v1117
        %v1119 = vshll.u32 %v1079, 8
        %v1120 = vand.u32 %v1119, 65535
        %v1121 = vshrl.u32 %v1119, 16
        %v1122 = vand.u32 %v1118, 65535
        %v1123 = vshrl.u32 %v1118, 16
        %v1124 = vmul.u32 %v1120, %v1122
        %v1125 = vmul.u32 %v1120, %v1123
        %v1126 = vmul.u32 %v1121, %v1122
        %v1127 = vmul.u32 %v1121, %v1123
        %v1128 = vshll.u32 %v1125, 16
        %v1129 = vshrl.u32 %v1125, 16
        %v1130 = vshll.u32 %v1126, 16
        %v1131 = vshrl.u32 %v1126, 16
        %vm1132 = vc.u32 %v1124, %v1128
        %v1133 = vsel %vm1132, 1, 0
        %v1134 = vadd.s32 %v1124, %v1128
        %v1135 = vadd.s32 %v1127, %v1133
        %vm1136 = vc.u32 %v1134, %v1130
        %v1137 = vsel %vm1136, 1, 0
        %v1138 = vadd.s32 %v1134, %v1130
        %v1139 = vadd.s32 %v1135, %v1137
        %v1140 = vadd.s32 %v1139, %v1129
        %v1141 = vadd.s32 %v1140, %v1131
        %v1142 = vand.u32 %v1119, 65535
        %v1143 = vshrl.u32 %v1119, 16
        %v1144 = vand.u32 %v1114, 65535
        %v1145 = vshrl.u32 %v1114, 16
        %v1146 = vmul.u32 %v1142, %v1144
        %v1147 = vmul.u32 %v1142, %v1145
        %v1148 = vmul.u32 %v1143, %v1144
        %v1149 = vmul.u32 %v1143, %v1145
        %v1150 = vshll.u32 %v1147, 16
        %v1151 = vshrl.u32 %v1147, 16
        %v1152 = vshll.u32 %v1148, 16
        %v1153 = vshrl.u32 %v1148, 16
        %vm1154 = vc.u32 %v1146, %v1150
        %v1155 = vsel %vm1154, 1, 0
        %v1156 = vadd.s32 %v1146, %v1150
        %v1157 = vadd.s32 %v1149, %v1155
        %vm1158 = vc.u32 %v1156, %v1152
        %v1159 = vsel %vm1158, 1, 0
        %v1160 = vadd.s32 %v1156, %v1152
        %v1161 = vadd.s32 %v1157, %v1159
        %v1162 = vadd.s32 %v1161, %v1151
        %v1163 = vadd.s32 %v1162, %v1153
        %v1164 = vmul.u32 %v1119, %v1110
        %v1165 = vadd.s32 %v1141, %v1160
        %vm1166 = vc.u32 %v1141, %v1160
        %v1167 = vadd.s32 %v1163, 1
        %v1168 = vsel %vm1166, %v1167, %v1163
        %v1169 = vadd.s32 %v1164, %v1168
        %v1170 = vadd.s32 %v1169, 536870912
        %v1171 = vshrl.u32 %v1170, 30
        %v1172 = vshll.u32 %v1171, 30
        %v1173 = vsub.s32 %v1169, %v1172
        %vm1174 = vcmp.lt.s32.totalorder %v1173, 0
        %v1175 = vsub.s32 0, %v1173
        %v1176 = vsel %vm1174, %v1175, %v1173
        %v1177 = vclz %v1176
        %v1178 = vsub.s32 %v1177, 2
        %vm1179 = vcmp.gt.s32.totalorder 0, %v1178
        %v1180 = vsel %vm1179, 0, %v1178
        %v1181 = vsub.s32 32, %v1180
        %v1182 = vshll.u32 %v1173, %v1180
        %v1183 = vshrl.u32 %v1165, %v1181
        %v1184 = vor.u32 %v1182, %v1183
        %v1185 = vsub.s32 4294967266, %v1180
        %v1186 = vadd.s32 %v1185, 127
        %v1187 = vshll.u32 %v1186, 23
        %v1188 = vor.u32 4788187, %v1187
        %v1189 = vand.u32 2147483647, %v1188
        %v1191 = vcvt.s32.f32 %v1184
        %v1192 = vmul.f32 %v1191, %v1189
        %v1193 = vxor.u32 %v1192, 2147483648
        %v1194 = vsel %vm1073, %v1193, %v1192
        %v1195 = vsub.s32 4, %v1171
        %v1196 = vsel %vm1073, %v1195, %v1171
        %v1197 = vsel %vm1072, %v298, %v1194
        %v1198 = vsel %vm1072, 0, %v1196
        %v1199 = vmul.f32 %v1197, %v1197
        %v1200 = vmul.f32 %v1199, -0.001358992
        %v1201 = vadd.f32 %v1200, 0.041655596
        %v1202 = vmul.f32 %v1199, %v1201
        %v1203 = vadd.f32 %v1202, -0.4999988
        %v1204 = vmul.f32 %v1199, %v1203
        %v1205 = vadd.f32 1.0, %v1204
        %v1206 = vmul.f32 %v1197, %v1197
        %v1207 = vmul.f32 %v1206, -0.00019511016
        %v1208 = vadd.f32 %v1207, 0.008332121
        %v1209 = vmul.f32 %v1206, %v1208
        %v1210 = vadd.f32 %v1209, -0.16666654
        %v1211 = vmul.f32 %v1206, %v1210
        %v1212 = vadd.f32 %v1211, 1.0
        %v1213 = vmul.f32 %v1212, %v1197
        %vm1214 = vweird.f32 %v298
        %v1215 = vand.u32 %v1198, 3
        %vm1216 = vcmp.lt.s32.totalorder %v1215, 2
        %vm1217 = vcmp.eq.s32.totalorder %v1215, 0
        %v1218 = vxor.u32 %v1213, 2147483648
        %v1219 = vsel %vm1217, %v1205, %v1218
        %vm1220 = vcmp.eq.s32.totalorder %v1215, 2
        %v1221 = vxor.u32 %v1205, 2147483648
        %v1222 = vsel %vm1220, %v1221, %v1213
        %v1223 = vsel %vm1216, %v1219, %v1222
        %v1224 = vsel %vm1214, nan, %v1223
        %v1225 = vand.u32 2147483647, %v299
        %vm1226 = vcmp.le.f32.partialorder %v1225, 0.7853982
        %vm1227 = vcmp.lt.s32.totalorder %v299, 0
        %v1228 = vand.u32 %v299, 2139095040
        %v1229 = vshrl.u32 %v1228, 23
        %v1230 = vsub.s32 %v1229, 127
        %v1231 = vand.u32 2147483647, %v299
        %v1232 = vand.u32 %v1231, 8388607
        %v1233 = vor.u32 %v1232, 8388608
        %v1234 = vsub.s32 0, %v1233
        %v1235 = vadd.s32 %v1230, 1
        %vm1236 = vcmp.gt.s32.totalorder %v1235, 0
        %v1237 = vsel %vm1236, %v1235, 0
        %v1238 = vshrl.u32 %v1237, 5
        %v1239 = vand.u32 %v1237, 31
        %v1240 = vsub.s32 32, %v1239
        %v1241 = vshrl.u32 683565275, %v1240
        %v1242 = vshll.u32 683565275, %v1239
        %v1243 = vshrl.u32 2475754826, %v1240
        %v1244 = vor.u32 %v1242, %v1243
        %v1245 = vshll.u32 2475754826, %v1239
        %v1246 = vshrl.u32 2131351028, %v1240
        %v1247 = vor.u32 %v1245, %v1246
        %v1248 = vshll.u32 2131351028, %v1239
        %v1249 = vshrl.u32 2102212464, %v1240
        %v1250 = vor.u32 %v1248, %v1249
        %v1251 = vshll.u32 2102212464, %v1239
        %v1252 = vshrl.u32 920167782, %v1240
        %v1253 = vor.u32 %v1251, %v1252
        %v1254 = vshll.u32 920167782, %v1239
        %v1255 = vshrl.u32 1326507024, %v1240
        %v1256 = vor.u32 %v1254, %v1255
        %vm1257 = vcmp.lt.s32.totalorder %v1238, 1
        %vm1258 = vcmp.lt.s32.totalorder %v1238, 2
        %vm1259 = vcmp.lt.s32.totalorder %v1238, 3
        %vm1260 = vcmp.lt.s32.totalorder %v1238, 4
        %v1261 = vsel %vm1257, %v1241, %v1244
        %v1262 = vsel %vm1260, %v1250, 2102212464
        %v1263 = vsel %vm1259, %v1247, %v1262
        %v1264 = vsel %vm1258, %v1261, %v1263
        %v1265 = vsel %vm1257, %v1244, %v1247
        %v1266 = vsel %vm1260, %v1253, 920167782
        %v1267 = vsel %vm1259, %v1250, %v1266
        %v1268 = vsel %vm1258, %v1265, %v1267
        %v1269 = vsel %vm1257, %v1247, %v1250
        %v1270 = vsel %vm1260, %v1256, 1326507024
        %v1271 = vsel %vm1259, %v1253, %v1270
        %v1272 = vsel %vm1258, %v1269, %v1271
        %v1273 = vshll.u32 %v1233, 8
        %v1274 = vand.u32 %v1273, 65535
        %v1275 = vshrl.u32 %v1273, 16
        %v1276 = vand.u32 %v1272, 65535
        %v1277 = vshrl.u32 %v1272, 16
        %v1278 = vmul.u32 %v1274, %v1276
        %v1279 = vmul.u32 %v1274, %v1277
        %v1280 = vmul.u32 %v1275, %v1276
        %v1281 = vmul.u32 %v1275, %v1277
        %v1282 = vshll.u32 %v1279, 16
        %v1283 = vshrl.u32 %v1279, 16
        %v1284 = vshll.u32 %v1280, 16
        %v1285 = vshrl.u32 %v1280, 16
        %vm1286 = vc.u32 %v1278, %v1282
        %v1287 = vsel %vm1286, 1, 0
        %v1288 = vadd.s32 %v1278, %v1282
        %v1289 = vadd.s32 %v1281, %v1287
        %vm1290 = vc.u32 %v1288, %v1284
        %v1291 = vsel %vm1290, 1, 0
        %v1292 = vadd.s32 %v1288, %v1284
        %v1293 = vadd.s32 %v1289, %v1291
        %v1294 = vadd.s32 %v1293, %v1283
        %v1295 = vadd.s32 %v1294, %v1285
        %v1296 = vand.u32 %v1273, 65535
        %v1297 = vshrl.u32 %v1273, 16
        %v1298 = vand.u32 %v1268, 65535
        %v1299 = vshrl.u32 %v1268, 16
        %v1300 = vmul.u32 %v1296, %v1298
        %v1301 = vmul.u32 %v1296, %v1299
        %v1302 = vmul.u32 %v1297, %v1298
        %v1303 = vmul.u32 %v1297, %v1299
        %v1304 = vshll.u32 %v1301, 16
        %v1305 = vshrl.u32 %v1301, 16
        %v1306 = vshll.u32 %v1302, 16
        %v1307 = vshrl.u32 %v1302, 16
        %vm1308 = vc.u32 %v1300, %v1304
        %v1309 = vsel %vm1308, 1, 0
        %v1310 = vadd.s32 %v1300, %v1304
        %v1311 = vadd.s32 %v1303, %v1309
        %vm1312 = vc.u32 %v1310, %v1306
        %v1313 = vsel %vm1312, 1, 0
        %v1314 = vadd.s32 %v1310, %v1306
        %v1315 = vadd.s32 %v1311, %v1313
        %v1316 = vadd.s32 %v1315, %v1305
        %v1317 = vadd.s32 %v1316, %v1307
        %v1318 = vmul.u32 %v1273, %v1264
        %v1319 = vadd.s32 %v1295, %v1314
        %vm1320 = vc.u32 %v1295, %v1314
        %v1321 = vadd.s32 %v1317, 1
        %v1322 = vsel %vm1320, %v1321, %v1317
        %v1323 = vadd.s32 %v1318, %v1322
        %v1324 = vadd.s32 %v1323, 536870912
        %v1325 = vshrl.u32 %v1324, 30
        %v1326 = vshll.u32 %v1325, 30
        %v1327 = vsub.s32 %v1323, %v1326
        %vm1328 = vcmp.lt.s32.totalorder %v1327, 0
        %v1329 = vsub.s32 0, %v1327
        %v1330 = vsel %vm1328, %v1329, %v1327
        %v1331 = vclz %v1330
        %v1332 = vsub.s32 %v1331, 2
        %vm1333 = vcmp.gt.s32.totalorder 0, %v1332
        %v1334 = vsel %vm1333, 0, %v1332
        %v1335 = vsub.s32 32, %v1334
        %v1336 = vshll.u32 %v1327, %v1334
        %v1337 = vshrl.u32 %v1319, %v1335
        %v1338 = vor.u32 %v1336, %v1337
        %v1339 = vsub.s32 4294967266, %v1334
        %v1340 = vadd.s32 %v1339, 127
        %v1341 = vshll.u32 %v1340, 23
        %v1342 = vor.u32 4788187, %v1341
        %v1343 = vand.u32 2147483647, %v1342
        %v1345 = vcvt.s32.f32 %v1338
        %v1346 = vmul.f32 %v1345, %v1343
        %v1347 = vxor.u32 %v1346, 2147483648
        %v1348 = vsel %vm1227, %v1347, %v1346
        %v1349 = vsub.s32 4, %v1325
        %v1350 = vsel %vm1227, %v1349, %v1325
        %v1351 = vsel %vm1226, %v299, %v1348
        %v1352 = vsel %vm1226, 0, %v1350
        %v1353 = vmul.f32 %v1351, %v1351
        %v1354 = vmul.f32 %v1353, -0.001358992
        %v1355 = vadd.f32 %v1354, 0.041655596
        %v1356 = vmul.f32 %v1353, %v1355
        %v1357 = vadd.f32 %v1356, -0.4999988
        %v1358 = vmul.f32 %v1353, %v1357
        %v1359 = vadd.f32 1.0, %v1358
        %v1360 = vmul.f32 %v1351, %v1351
        %v1361 = vmul.f32 %v1360, -0.00019511016
        %v1362 = vadd.f32 %v1361, 0.008332121
        %v1363 = vmul.f32 %v1360, %v1362
        %v1364 = vadd.f32 %v1363, -0.16666654
        %v1365 = vmul.f32 %v1360, %v1364
        %v1366 = vadd.f32 %v1365, 1.0
        %v1367 = vmul.f32 %v1366, %v1351
        %vm1368 = vweird.f32 %v299
        %v1369 = vand.u32 %v1352, 3
        %vm1370 = vcmp.lt.s32.totalorder %v1369, 2
        %vm1371 = vcmp.eq.s32.totalorder %v1369, 0
        %v1372 = vxor.u32 %v1367, 2147483648
        %v1373 = vsel %vm1371, %v1359, %v1372
        %vm1374 = vcmp.eq.s32.totalorder %v1369, 2
        %v1375 = vxor.u32 %v1359, 2147483648
        %v1376 = vsel %vm1374, %v1375, %v1367
        %v1377 = vsel %vm1370, %v1373, %v1376
        %v1378 = vsel %vm1368, nan, %v1377
        %v1379 = vand.u32 2147483647, %v300
        %vm1380 = vcmp.le.f32.partialorder %v1379, 0.7853982
        %vm1381 = vcmp.lt.s32.totalorder %v300, 0
        %v1382 = vand.u32 %v300, 2139095040
        %v1383 = vshrl.u32 %v1382, 23
        %v1384 = vsub.s32 %v1383, 127
        %v1385 = vand.u32 2147483647, %v300
        %v1386 = vand.u32 %v1385, 8388607
        %v1387 = vor.u32 %v1386, 8388608
        %v1388 = vsub.s32 0, %v1387
        %v1389 = vadd.s32 %v1384, 1
        %vm1390 = vcmp.gt.s32.totalorder %v1389, 0
        %v1391 = vsel %vm1390, %v1389, 0
        %v1392 = vshrl.u32 %v1391, 5
        %v1393 = vand.u32 %v1391, 31
        %v1394 = vsub.s32 32, %v1393
        %v1395 = vshrl.u32 683565275, %v1394
        %v1396 = vshll.u32 683565275, %v1393
        %v1397 = vshrl.u32 2475754826, %v1394
        %v1398 = vor.u32 %v1396, %v1397
        %v1399 = vshll.u32 2475754826, %v1393
        %v1400 = vshrl.u32 2131351028, %v1394
        %v1401 = vor.u32 %v1399, %v1400
        %v1402 = vshll.u32 2131351028, %v1393
        %v1403 = vshrl.u32 2102212464, %v1394
        %v1404 = vor.u32 %v1402, %v1403
        %v1405 = vshll.u32 2102212464, %v1393
        %v1406 = vshrl.u32 920167782, %v1394
        %v1407 = vor.u32 %v1405, %v1406
        %v1408 = vshll.u32 920167782, %v1393
        %v1409 = vshrl.u32 1326507024, %v1394
        %v1410 = vor.u32 %v1408, %v1409
        %vm1411 = vcmp.lt.s32.totalorder %v1392, 1
        %vm1412 = vcmp.lt.s32.totalorder %v1392, 2
        %vm1413 = vcmp.lt.s32.totalorder %v1392, 3
        %vm1414 = vcmp.lt.s32.totalorder %v1392, 4
        %v1415 = vsel %vm1411, %v1395, %v1398
        %v1416 = vsel %vm1414, %v1404, 2102212464
        %v1417 = vsel %vm1413, %v1401, %v1416
        %v1418 = vsel %vm1412, %v1415, %v1417
        %v1419 = vsel %vm1411, %v1398, %v1401
        %v1420 = vsel %vm1414, %v1407, 920167782
        %v1421 = vsel %vm1413, %v1404, %v1420
        %v1422 = vsel %vm1412, %v1419, %v1421
        %v1423 = vsel %vm1411, %v1401, %v1404
        %v1424 = vsel %vm1414, %v1410, 1326507024
        %v1425 = vsel %vm1413, %v1407, %v1424
        %v1426 = vsel %vm1412, %v1423, %v1425
        %v1427 = vshll.u32 %v1387, 8
        %v1428 = vand.u32 %v1427, 65535
        %v1429 = vshrl.u32 %v1427, 16
        %v1430 = vand.u32 %v1426, 65535
        %v1431 = vshrl.u32 %v1426, 16
        %v1432 = vmul.u32 %v1428, %v1430
        %v1433 = vmul.u32 %v1428, %v1431
        %v1434 = vmul.u32 %v1429, %v1430
        %v1435 = vmul.u32 %v1429, %v1431
        %v1436 = vshll.u32 %v1433, 16
        %v1437 = vshrl.u32 %v1433, 16
        %v1438 = vshll.u32 %v1434, 16
        %v1439 = vshrl.u32 %v1434, 16
        %vm1440 = vc.u32 %v1432, %v1436
        %v1441 = vsel %vm1440, 1, 0
        %v1442 = vadd.s32 %v1432, %v1436
        %v1443 = vadd.s32 %v1435, %v1441
        %vm1444 = vc.u32 %v1442, %v1438
        %v1445 = vsel %vm1444, 1, 0
        %v1446 = vadd.s32 %v1442, %v1438
        %v1447 = vadd.s32 %v1443, %v1445
        %v1448 = vadd.s32 %v1447, %v1437
        %v1449 = vadd.s32 %v1448, %v1439
        %v1450 = vand.u32 %v1427, 65535
        %v1451 = vshrl.u32 %v1427, 16
        %v1452 = vand.u32 %v1422, 65535
        %v1453 = vshrl.u32 %v1422, 16
        %v1454 = vmul.u32 %v1450, %v1452
        %v1455 = vmul.u32 %v1450, %v1453
        %v1456 = vmul.u32 %v1451, %v1452
        %v1457 = vmul.u32 %v1451, %v1453
        %v1458 = vshll.u32 %v1455, 16
        %v1459 = vshrl.u32 %v1455, 16
        %v1460 = vshll.u32 %v1456, 16
        %v1461 = vshrl.u32 %v1456, 16
        %vm1462 = vc.u32 %v1454, %v1458
        %v1463 = vsel %vm1462, 1, 0
        %v1464 = vadd.s32 %v1454, %v1458
        %v1465 = vadd.s32 %v1457, %v1463
        %vm1466 = vc.u32 %v1464, %v1460
        %v1467 = vsel %vm1466, 1, 0
        %v1468 = vadd.s32 %v1464, %v1460
        %v1469 = vadd.s32 %v1465, %v1467
        %v1470 = vadd.s32 %v1469, %v1459
        %v1471 = vadd.s32 %v1470, %v1461
        %v1472 = vmul.u32 %v1427, %v1418
        %v1473 = vadd.s32 %v1449, %v1468
        %vm1474 = vc.u32 %v1449, %v1468
        %v1475 = vadd.s32 %v1471, 1
        %v1476 = vsel %vm1474, %v1475, %v1471
        %v1477 = vadd.s32 %v1472, %v1476
        %v1478 = vadd.s32 %v1477, 536870912
        %v1479 = vshrl.u32 %v1478, 30
        %v1480 = vshll.u32 %v1479, 30
        %v1481 = vsub.s32 %v1477, %v1480
        %vm1482 = vcmp.lt.s32.totalorder %v1481, 0
        %v1483 = vsub.s32 0, %v1481
        %v1484 = vsel %vm1482, %v1483, %v1481
        %v1485 = vclz %v1484
        %v1486 = vsub.s32 %v1485, 2
        %vm1487 = vcmp.gt.s32.totalorder 0, %v1486
        %v1488 = vsel %vm1487, 0, %v1486
        %v1489 = vsub.s32 32, %v1488
        %v1490 = vshll.u32 %v1481, %v1488
        %v1491 = vshrl.u32 %v1473, %v1489
        %v1492 = vor.u32 %v1490, %v1491
        %v1493 = vsub.s32 4294967266, %v1488
        %v1494 = vadd.s32 %v1493, 127
        %v1495 = vshll.u32 %v1494, 23
        %v1496 = vor.u32 4788187, %v1495
        %v1497 = vand.u32 2147483647, %v1496
        %v1499 = vcvt.s32.f32 %v1492
        %v1500 = vmul.f32 %v1499, %v1497
        %v1501 = vxor.u32 %v1500, 2147483648
        %v1502 = vsel %vm1381, %v1501, %v1500
        %v1503 = vsub.s32 4, %v1479
        %v1504 = vsel %vm1381, %v1503, %v1479
        %v1505 = vsel %vm1380, %v300, %v1502
        %v1506 = vsel %vm1380, 0, %v1504
        %v1507 = vmul.f32 %v1505, %v1505
        %v1508 = vmul.f32 %v1507, -0.001358992
        %v1509 = vadd.f32 %v1508, 0.041655596
        %v1510 = vmul.f32 %v1507, %v1509
        %v1511 = vadd.f32 %v1510, -0.4999988
        %v1512 = vmul.f32 %v1507, %v1511
        %v1513 = vadd.f32 1.0, %v1512
        %v1514 = vmul.f32 %v1505, %v1505
        %v1515 = vmul.f32 %v1514, -0.00019511016
        %v1516 = vadd.f32 %v1515, 0.008332121
        %v1517 = vmul.f32 %v1514, %v1516
        %v1518 = vadd.f32 %v1517, -0.16666654
        %v1519 = vmul.f32 %v1514, %v1518
        %v1520 = vadd.f32 %v1519, 1.0
        %v1521 = vmul.f32 %v1520, %v1505
        %vm1522 = vweird.f32 %v300
        %v1523 = vand.u32 %v1506, 3
        %vm1524 = vcmp.lt.s32.totalorder %v1523, 2
        %vm1525 = vcmp.eq.s32.totalorder %v1523, 0
        %v1526 = vxor.u32 %v1521, 2147483648
        %v1527 = vsel %vm1525, %v1513, %v1526
        %vm1528 = vcmp.eq.s32.totalorder %v1523, 2
        %v1529 = vxor.u32 %v1513, 2147483648
        %v1530 = vsel %vm1528, %v1529, %v1521
        %v1531 = vsel %vm1524, %v1527, %v1530
        %v1532 = vsel %vm1522, nan, %v1531
        %v1533 = vsub.f32 1.0, %v454
        %v1534 = vsub.f32 1.0, %v608
        %v1535 = vsub.f32 1.0, %v762
        %v1536 = vsub.f32 1.0, %v916
        %v1537 = vsub.f32 1.0, %v1070
        %v1538 = vsub.f32 1.0, %v1224
        %v1539 = vsub.f32 1.0, %v1378
        %v1540 = vsub.f32 1.0, %v1532
        %1542 = vset.pattern.permute.xlu0 0
        %1543 = vperm.xlu0 %1542, %v281
        %v1544 = vpop.permute.xlu0 %1543
        %1547 = vset.pattern.permute.xlu0 0
        %1548 = vperm.xlu0 %1547, %v282
        %v1549 = vpop.permute.xlu0 %1548
        %v1551 = vmul.f32 %v1544, %v1533
        %v1552 = vmul.f32 %v1544, %v1534
        %v1553 = vmul.f32 %v1544, %v1535
        %v1554 = vmul.f32 %v1544, %v1536
        %v1555 = vmul.f32 %v1549, %v1537
        %v1556 = vmul.f32 %v1549, %v1538
        %v1557 = vmul.f32 %v1549, %v1539
        %v1558 = vmul.f32 %v1549, %v1540
        %v1559 = vadd.f32 %v271, %v1551
        %v1560 = vadd.f32 %v272, %v1552
        %v1561 = vadd.f32 %v273, %v1553
        %v1562 = vadd.f32 %v274, %v1554
        %v1563 = vadd.f32 %v275, %v1555
        %v1564 = vadd.f32 %v276, %v1556
        %v1565 = vadd.f32 %v277, %v1557
        %v1566 = vadd.f32 %v278, %v1558
        %1567 = vst [vmem:[%s254] sm:$0xff] %v1559
        %1568 = vst [vmem:[%s254 + $0x8] sm:$0xff] %v1560
        %1569 = vst [vmem:[%s254 + $0x10] sm:$0xff] %v1561
        %1570 = vst [vmem:[%s254 + $0x18] sm:$0xff] %v1562
        %1571 = vst [vmem:[%s254 + $0x20] sm:$0xff] %v1563
        %1572 = vst [vmem:[%s254 + $0x28] sm:$0xff] %v1564
        %1573 = vst [vmem:[%s254 + $0x30] sm:$0xff] %v1565
        %1574 = vst [vmem:[%s254 + $0x38] sm:$0xff] %v1566
        %s1575 = sand.u32 %s133, 1
        %s1576 = scalar_lea.sflag [#allocation4], %s1575
        %s1577 = sand.u32 %s133, 1
        %s1578 = smul.addr %s1577, 64
        %s1579 = scalar_lea.vmem [#allocation5], %s1578
        // Predicated region
        $region37: #{tpu_custom_call.1} parent=31 // pred_check
          %p1580 = pneg %p143
        $region38: #{tpu_custom_call.1} parent=31 // pred_check_branch
          %1582 = sbr.rel (%p1580) target = $region40
        $region39: #{tpu_custom_call.1} parent=31 // pred_region
          %s1583 = smul.u32 2, %s26
          %s1584 = smul.u32 4, %s27
          %1586 = vsyncadd %s1576, 0
          %s1587 = smul.addr %s1583, 4
          %s1588 = sadd.s32 %s1584, %s1587
          %s1589 = smul.addr %s25, 8
          %s1590 = sadd.s32 %s1588, %s1589
          %s1591 = smul.addr %s1590, 8
          %s1592 = scalar_lea.hbm %s3, %s1591
          %s1593 = sshll.u32 %s1579, 4
          %s1594 = int_to_ptr.vmem [resolvable:$true] %s1593
          %s1595 = sshll.u32 %s1592, 4
          %s1596 = int_to_ptr.hbm [resolvable:$true] %s1595
          %1601 = dma.vmem_to_hbm [thread:$0]  %s1594, 1024, %s1596, %s1576, 512, 512, 32
        $region40: #{tpu_custom_call.1} parent=31 // pred_fallthru
          _
      $region32: #{tpu_custom_call.1} parent=5 // pred_fallthru
        _
      %p1602 = scmp.le.s32.totalorder 2, %s15
      // Predicated region
      $region41: #{tpu_custom_call.1} parent=5 // pred_check
        %p1603 = pneg %p1602
      $region42: #{tpu_custom_call.1} parent=5 // pred_check_branch
        %1605 = sbr.rel (%p1603) target = $region44
      $region43: #{tpu_custom_call.1} parent=5 // pred_region
        %s1606 = ssub.s32 %s15, 2
        // Predicated region
        $region45: #{tpu_custom_call.1} parent=43 // pred_check
          %p1607 = pneg %p149
        $region46: #{tpu_custom_call.1} parent=43 // pred_check_branch
          %1609 = sbr.rel (%p1607) target = $region48
        $region47: #{tpu_custom_call.1} parent=43 // pred_region
          %s1610 = sand.u32 %s134, 1
          %s1611 = scalar_lea.sflag [#allocation4], %s1610
          %s1612 = sand.u32 %s134, 1
          %s1613 = smul.addr %s1612, 64
          %s1614 = scalar_lea.vmem [#allocation5], %s1613
          %1616 = dma.done %s1611, 1024
        $region48: #{tpu_custom_call.1} parent=43 // pred_fallthru
          _
      $region44: #{tpu_custom_call.1} parent=5 // pred_fallthru
        _
    $region6: #{tpu_custom_call.1} parent=1 // loop_footer
      %s19 = sadd.s32 1, %s15
    $region7: #{tpu_custom_call.1} parent=1 // loop_footer_branch
      %14 = sbr.rel target = $region3
    $region8: #{tpu_custom_call.1} parent=1 // loop_exit
      _
    %1617 = vsyncpa [#allocation3], 1
    %s1618 = scalar_lea.sflag [#allocation3], 1
    %1619 = vsyncpa %s1618, 1
    %1620 = vsyncpa [#allocation4], 1
    %s1621 = scalar_lea.sflag [#allocation4], 1
    %1622 = vsyncpa %s1621, 1

</llo_original>
